<compile_context>
chip_gen: v7x
topology: tpu7x:2x2x1
jax: 0.10.0
libtpu: 0.0.40
codegen_flags: <defaults>
</compile_context>

<pallas_src>
import functools
import numpy as np
import jax
import jax.numpy as jnp
from jax.experimental import pallas as pl
from jax.experimental.pallas import tpu as pltpu


def _round_up(v, m):
    return -(-v // m) * m


def _temporal_mlp_kernel(w1xy_ref, w_ref, bwf_ref, xyt_ref, out_ref,
                         *, num_layers, k_xy):
    """Fused Fourier embedding + L-layer MLP on one lane-dense batch tile.

    Layout: batch on the 128-lane axis, features on sublanes.
      w1xy_ref: (D, k_xy)    fc1^T columns for the [x, y] inputs
      w_ref   : (L+1, D, D)  slab 0/1 = fc1^T cols for sin/cos(t_embed);
                             slabs 2..L = fc2^T..fcL^T (zero padded)
      bwf_ref : (L+1, D, 1)  rows 0..L-1 = biases b1..bL; row L = W_fourier*2*pi
      xyt_ref : (k_xy+1, TB) rows 0..k_xy-1 = [x; y]^T, row k_xy = t
      out_ref : (out_dim, TB)
    """
    # Gaussian Fourier projection of t (EUP). Padded Fourier rows are 0, so
    # sin -> 0 and cos -> 1; the matching zero-padded slab columns contribute
    # nothing to the matmuls below.
    t_row = xyt_ref[k_xy:k_xy + 1, :]                         # (1, TB)
    xp = bwf_ref[num_layers] * t_row                          # (D, TB)
    s = jnp.sin(xp)
    c = jnp.cos(xp)

    # fc1: W1^T @ concat([x, t_embed, y])^T expressed as partial matmuls
    # (no lane-unaligned in-kernel concat needed).
    h = (jnp.dot(w1xy_ref[...], xyt_ref[:k_xy, :],
                 preferred_element_type=jnp.float32)
         + jnp.dot(w_ref[0], s, preferred_element_type=jnp.float32)
         + jnp.dot(w_ref[1], c, preferred_element_type=jnp.float32)
         + bwf_ref[0])
    h = jnp.tanh(h)

    # fc2..fcL (tanh on all but the last layer).
    for l in range(1, num_layers):
        h = jnp.dot(w_ref[l + 1], h, preferred_element_type=jnp.float32) + bwf_ref[l]
        if l < num_layers - 1:
            h = jnp.tanh(h)

    out_ref[...] = h[:out_ref.shape[0], :].astype(out_ref.dtype)


def init_params(key, x_dim, y_dim, embed_dim, hidden_layers, output_dim):
    """Deterministic synthetic parameters (matches the PyTorch module's shapes)."""
    input_dim = x_dim + y_dim + embed_dim
    dims = [input_dim] + list(hidden_layers) + [output_dim]
    keys = jax.random.split(key, 2 * (len(dims) - 1) + 1)
    params = {}
    # GaussianFourierProjection: W = randn(embed_dim // 2) * scale (scale=30.0)
    params["W_fourier"] = jax.random.normal(keys[0], (embed_dim // 2,), jnp.float32) * 30.0
    for i in range(len(dims) - 1):
        fan_in, fan_out = dims[i], dims[i + 1]
        bound = 1.0 / np.sqrt(fan_in)
        params[f"w{i+1}"] = jax.random.uniform(
            keys[1 + 2 * i], (fan_in, fan_out), jnp.float32, -bound, bound)
        params[f"b{i+1}"] = jax.random.uniform(
            keys[2 + 2 * i], (1, fan_out), jnp.float32, -bound, bound)
    return params


def pack_params(params, x_dim, y_dim):
    """One-time packing of parameters into transposed, zero-padded slabs.

    Hoisted out of the forward (perf review item): call once at init time.
    Returns (packed_arrays, static_meta).
    """
    half = params["W_fourier"].shape[0]
    embed_dim = 2 * half
    num_layers = sum(1 for k in params if k[0] == "w" and k[1:].isdigit())
    w_shapes = [params[f"w{i+1}"].shape for i in range(num_layers)]
    out_dim = w_shapes[-1][1]
    k_xy = x_dim + y_dim
    assert w_shapes[0][0] == x_dim + embed_dim + y_dim

    # Padded feature width for the packed slabs (multiple of 8 sublanes).
    D = _round_up(max([half] + [d for s in w_shapes for d in s]), 8)

    w1 = params["w1"]
    hid0 = w1.shape[1]
    w1_x = w1[:x_dim]
    w1_sin = w1[x_dim:x_dim + half]
    w1_cos = w1[x_dim + half:x_dim + embed_dim]
    w1_y = w1[x_dim + embed_dim:]

    # fc1^T columns for the [x; y] rows of the input slab.
    w1xy = jnp.zeros((D, k_xy), jnp.float32)
    w1xy = w1xy.at[:hid0, :].set(jnp.concatenate([w1_x, w1_y], axis=0).T)

    n_slabs = num_layers + 1
    W_all = jnp.zeros((n_slabs, D, D), jnp.float32)
    W_all = W_all.at[0, :hid0, :half].set(w1_sin.T)
    W_all = W_all.at[1, :hid0, :half].set(w1_cos.T)
    for i in range(1, num_layers):
        w = params[f"w{i+1}"]
        W_all = W_all.at[i + 1, :w.shape[1], :w.shape[0]].set(w.T)

    # Biases b1..bL (rows 0..L-1) and W_fourier * 2*pi (row L), lane-1 columns.
    bwf = jnp.zeros((num_layers + 1, D, 1), jnp.float32)
    for i in range(num_layers):
        b = params[f"b{i+1}"].reshape(-1)
        bwf = bwf.at[i, :b.shape[0], 0].set(b)
    bwf = bwf.at[num_layers, :half, 0].set(
        params["W_fourier"] * jnp.float32(2.0 * np.pi))

    # Cost-estimate numbers from the TRUE (unpadded) dims.
    flops_per_row = 2 * (k_xy * hid0 + 2 * half * hid0)
    trans_per_row = 2 * half + hid0          # sin, cos, tanh(fc1)
    for i in range(1, num_layers):
        fi, fo = w_shapes[i]
        flops_per_row += 2 * fi * fo
        if i < num_layers - 1:
            trans_per_row += fo
    param_bytes = 4 * (D * k_xy + n_slabs * D * D + (num_layers + 1) * D)

    packed = dict(w1xy=w1xy, W=W_all, bwf=bwf)
    meta = dict(num_layers=num_layers, k_xy=k_xy, out_dim=out_dim, D=D,
                flops_per_row=flops_per_row, trans_per_row=trans_per_row,
                param_bytes=param_bytes)
    return packed, meta


def temporal_mlp_forward(packed, meta, x, t, y, *, tile_b=4096):
    B = x.shape[0]
    num_layers = meta["num_layers"]
    k_xy = meta["k_xy"]
    out_dim = meta["out_dim"]
    D = meta["D"]
    kxy1 = k_xy + 1
    assert x.shape[1] + y.shape[1] == k_xy

    # ---- batch tiling: batch sits on the 128-lane axis ----
    tile_b = _round_up(max(128, min(int(tile_b), B)), 128)
    if B > 128:
        # keep >= 2 grid steps so v7x megacore can shard the batch axis
        tile_b = min(tile_b, _round_up(-(-B // 2), 128))
    Bp = _round_up(B, tile_b)
    grid = (Bp // tile_b,)

    # Transposed [x; y; t] input slab (k_xy+1, Bp); pad the lane (batch) axis.
    t_row = jnp.asarray(t, jnp.float32).reshape(1, B)
    xyt = jnp.concatenate(
        [x.astype(jnp.float32).T, y.astype(jnp.float32).T, t_row], axis=0)
    if Bp != B:
        xyt = jnp.pad(xyt, ((0, 0), (0, Bp - B)))

    kernel = functools.partial(_temporal_mlp_kernel,
                               num_layers=num_layers, k_xy=k_xy)

    cost = pl.CostEstimate(
        flops=Bp * meta["flops_per_row"],
        transcendentals=Bp * meta["trans_per_row"],
        bytes_accessed=4 * Bp * (kxy1 + out_dim) + meta["param_bytes"],
    )

    out_t = pl.pallas_call(
        kernel,
        out_shape=jax.ShapeDtypeStruct((out_dim, Bp), jnp.float32),
        grid=grid,
        in_specs=[
            pl.BlockSpec((D, k_xy), lambda i: (0, 0)),                  # fc1 [x,y] cols
            pl.BlockSpec((num_layers + 1, D, D), lambda i: (0, 0, 0)),  # packed weights
            pl.BlockSpec((num_layers + 1, D, 1), lambda i: (0, 0, 0)),  # biases + Fourier
            pl.BlockSpec((kxy1, tile_b), lambda i: (0, i)),             # [x; y; t] tile
        ],
        out_specs=pl.BlockSpec((out_dim, tile_b), lambda i: (0, i)),
        compiler_params=pltpu.CompilerParams(
            dimension_semantics=("parallel",)),
        cost_estimate=cost,
    )(packed["w1xy"], packed["W"], packed["bwf"], xyt)

    return out_t[:, :B].T


def temporal_mlp_reference(params, x, t, y):
    """Pure-JAX reference of the PyTorch forward."""
    W = params["W_fourier"]
    t = jnp.asarray(t).reshape(-1)
    x_proj = t[:, None] * W[None, :] * (2.0 * np.pi)
    t_embed = jnp.concatenate([jnp.sin(x_proj), jnp.cos(x_proj)], axis=-1)
    h = jnp.concatenate([x, t_embed, y], axis=1)
    num_layers = sum(1 for k in params if k[0] == "w" and k[1:].isdigit())
    for i in range(1, num_layers):
        h = jnp.tanh(h @ params[f"w{i}"] + params[f"b{i}"])
    return h @ params[f"w{num_layers}"] + params[f"b{num_layers}"]


if __name__ == "__main__":
    # Small shapes consistent with the module:
    #   x: (batch, x_dim), t: (batch,), y: (batch, y_dim)
    #   fc1 input dim = x_dim + y_dim + embed_dim
    batch, x_dim, y_dim = 8, 4, 4
    embed_dim = 8
    hidden_layers = [32, 32, 32, 32, 32]
    output_dim = 4

    key = jax.random.PRNGKey(0)
    kp, kx, kt, ky = jax.random.split(key, 4)
    params = init_params(kp, x_dim, y_dim, embed_dim, hidden_layers, output_dim)

    x = jax.random.normal(kx, (batch, x_dim), jnp.float32)
    t = jax.random.uniform(kt, (batch,), jnp.float32)
    y = jax.random.normal(ky, (batch, y_dim), jnp.float32)

    packed, meta = pack_params(params, x_dim, y_dim)   # one-time prep (hoisted)

    out = jax.block_until_ready(temporal_mlp_forward(packed, meta, x, t, y))
    ref = jax.block_until_ready(temporal_mlp_reference(params, x, t, y))

    assert out.shape == (batch, output_dim)
    np.testing.assert_allclose(np.asarray(out), np.asarray(ref), rtol=1e-4, atol=1e-4)
    print("KERNEL_OK")
</pallas_src>

<mosaic_0001>
module attributes {stable_mosaic.version = 11 : i64} {
  func.func @_temporal_mlp_kernel(%arg0: i32, %arg1: memref<32x8xf32, #tpu.memory_space<vmem>>, %arg2: memref<7x32x32xf32, #tpu.memory_space<vmem>>, %arg3: memref<7x32x1xf32, #tpu.memory_space<vmem>>, %arg4: memref<9x128xf32, #tpu.memory_space<vmem>>, %arg5: memref<4x128xf32, #tpu.memory_space<vmem>>) attributes {dimension_semantics = [#tpu.dimension_semantics<parallel>], iteration_bounds = array<i64: 1>, scalar_prefetch = 0 : i64, scratch_operands = 0 : i64, tpu.core_type = #tpu.core_type<tc>, window_params = [{pipeline_mode = #tpu.pipeline_mode<synchronous>, transform_indices = @transform_0, window_bounds = array<i64: 32, 8>}, {pipeline_mode = #tpu.pipeline_mode<synchronous>, transform_indices = @transform_1, window_bounds = array<i64: 7, 32, 32>}, {pipeline_mode = #tpu.pipeline_mode<synchronous>, transform_indices = @transform_2, window_bounds = array<i64: 7, 32, 1>}, {transform_indices = @transform_3, window_bounds = array<i64: 9, 128>}, {transform_indices = @transform_4, window_bounds = array<i64: 4, 128>}]} {
    %c8 = arith.constant 8 : index
    %c0 = arith.constant 0 : index
    %0 = vector.load %arg4[%c8, %c0] : memref<9x128xf32, #tpu.memory_space<vmem>>, vector<1x128xf32>
    %c6 = arith.constant 6 : index
    %c0_0 = arith.constant 0 : index
    %c0_1 = arith.constant 0 : index
    %1 = vector.load %arg3[%c6, %c0_0, %c0_1] : memref<7x32x1xf32, #tpu.memory_space<vmem>>, vector<1x32x1xf32>
    %2 = vector.shape_cast %1 : vector<1x32x1xf32> to vector<32x1xf32>
    %3 = vector.broadcast %2 : vector<32x1xf32> to vector<32x128xf32>
    %4 = vector.broadcast %0 : vector<1x128xf32> to vector<32x128xf32>
    %5 = arith.mulf %3, %4 : vector<32x128xf32>
    %6 = math.sin %5 : vector<32x128xf32>
    %7 = math.cos %5 : vector<32x128xf32>
    %c0_2 = arith.constant 0 : index
    %c0_3 = arith.constant 0 : index
    %8 = vector.load %arg1[%c0_2, %c0_3] : memref<32x8xf32, #tpu.memory_space<vmem>>, vector<32x8xf32>
    %c0_4 = arith.constant 0 : index
    %c0_5 = arith.constant 0 : index
    %9 = vector.load %arg4[%c0_4, %c0_5] : memref<9x128xf32, #tpu.memory_space<vmem>>, vector<8x128xf32>
    %cst = arith.constant dense<0.000000e+00> : vector<32x128xf32>
    %10 = tpu.matmul %8, %9, %cst {dimension_numbers = #tpu.dot_dimension_numbers<[1], [0], [0], [1], [0, 0, 1, 1], [], []>} : vector<32x8xf32>, vector<8x128xf32>, vector<32x128xf32> -> vector<32x128xf32>
    %c0_6 = arith.constant 0 : index
    %c0_7 = arith.constant 0 : index
    %c0_8 = arith.constant 0 : index
    %11 = vector.load %arg2[%c0_6, %c0_7, %c0_8] : memref<7x32x32xf32, #tpu.memory_space<vmem>>, vector<1x32x32xf32>
    %12 = vector.shape_cast %11 : vector<1x32x32xf32> to vector<32x32xf32>
    %cst_9 = arith.constant dense<0.000000e+00> : vector<32x128xf32>
    %13 = tpu.matmul %12, %6, %cst_9 {dimension_numbers = #tpu.dot_dimension_numbers<[1], [0], [0], [1], [0, 0, 1, 1], [], []>} : vector<32x32xf32>, vector<32x128xf32>, vector<32x128xf32> -> vector<32x128xf32>
    %14 = arith.addf %10, %13 : vector<32x128xf32>
    %c1 = arith.constant 1 : index
    %c0_10 = arith.constant 0 : index
    %c0_11 = arith.constant 0 : index
    %15 = vector.load %arg2[%c1, %c0_10, %c0_11] : memref<7x32x32xf32, #tpu.memory_space<vmem>>, vector<1x32x32xf32>
    %16 = vector.shape_cast %15 : vector<1x32x32xf32> to vector<32x32xf32>
    %cst_12 = arith.constant dense<0.000000e+00> : vector<32x128xf32>
    %17 = tpu.matmul %16, %7, %cst_12 {dimension_numbers = #tpu.dot_dimension_numbers<[1], [0], [0], [1], [0, 0, 1, 1], [], []>} : vector<32x32xf32>, vector<32x128xf32>, vector<32x128xf32> -> vector<32x128xf32>
    %18 = arith.addf %14, %17 : vector<32x128xf32>
    %c0_13 = arith.constant 0 : index
    %c0_14 = arith.constant 0 : index
    %c0_15 = arith.constant 0 : index
    %19 = vector.load %arg3[%c0_13, %c0_14, %c0_15] : memref<7x32x1xf32, #tpu.memory_space<vmem>>, vector<1x32x1xf32>
    %20 = vector.shape_cast %19 : vector<1x32x1xf32> to vector<32x1xf32>
    %21 = vector.broadcast %20 : vector<32x1xf32> to vector<32x128xf32>
    %22 = arith.addf %18, %21 : vector<32x128xf32>
    %23 = math.tanh %22 : vector<32x128xf32>
    %c2 = arith.constant 2 : index
    %c0_16 = arith.constant 0 : index
    %c0_17 = arith.constant 0 : index
    %24 = vector.load %arg2[%c2, %c0_16, %c0_17] : memref<7x32x32xf32, #tpu.memory_space<vmem>>, vector<1x32x32xf32>
    %25 = vector.shape_cast %24 : vector<1x32x32xf32> to vector<32x32xf32>
    %cst_18 = arith.constant dense<0.000000e+00> : vector<32x128xf32>
    %26 = tpu.matmul %25, %23, %cst_18 {dimension_numbers = #tpu.dot_dimension_numbers<[1], [0], [0], [1], [0, 0, 1, 1], [], []>} : vector<32x32xf32>, vector<32x128xf32>, vector<32x128xf32> -> vector<32x128xf32>
    %c1_19 = arith.constant 1 : index
    %c0_20 = arith.constant 0 : index
    %c0_21 = arith.constant 0 : index
    %27 = vector.load %arg3[%c1_19, %c0_20, %c0_21] : memref<7x32x1xf32, #tpu.memory_space<vmem>>, vector<1x32x1xf32>
    %28 = vector.shape_cast %27 : vector<1x32x1xf32> to vector<32x1xf32>
    %29 = vector.broadcast %28 : vector<32x1xf32> to vector<32x128xf32>
    %30 = arith.addf %26, %29 : vector<32x128xf32>
    %31 = math.tanh %30 : vector<32x128xf32>
    %c3 = arith.constant 3 : index
    %c0_22 = arith.constant 0 : index
    %c0_23 = arith.constant 0 : index
    %32 = vector.load %arg2[%c3, %c0_22, %c0_23] : memref<7x32x32xf32, #tpu.memory_space<vmem>>, vector<1x32x32xf32>
    %33 = vector.shape_cast %32 : vector<1x32x32xf32> to vector<32x32xf32>
    %cst_24 = arith.constant dense<0.000000e+00> : vector<32x128xf32>
    %34 = tpu.matmul %33, %31, %cst_24 {dimension_numbers = #tpu.dot_dimension_numbers<[1], [0], [0], [1], [0, 0, 1, 1], [], []>} : vector<32x32xf32>, vector<32x128xf32>, vector<32x128xf32> -> vector<32x128xf32>
    %c2_25 = arith.constant 2 : index
    %c0_26 = arith.constant 0 : index
    %c0_27 = arith.constant 0 : index
    %35 = vector.load %arg3[%c2_25, %c0_26, %c0_27] : memref<7x32x1xf32, #tpu.memory_space<vmem>>, vector<1x32x1xf32>
    %36 = vector.shape_cast %35 : vector<1x32x1xf32> to vector<32x1xf32>
    %37 = vector.broadcast %36 : vector<32x1xf32> to vector<32x128xf32>
    %38 = arith.addf %34, %37 : vector<32x128xf32>
    %39 = math.tanh %38 : vector<32x128xf32>
    %c4 = arith.constant 4 : index
    %c0_28 = arith.constant 0 : index
    %c0_29 = arith.constant 0 : index
    %40 = vector.load %arg2[%c4, %c0_28, %c0_29] : memref<7x32x32xf32, #tpu.memory_space<vmem>>, vector<1x32x32xf32>
    %41 = vector.shape_cast %40 : vector<1x32x32xf32> to vector<32x32xf32>
    %cst_30 = arith.constant dense<0.000000e+00> : vector<32x128xf32>
    %42 = tpu.matmul %41, %39, %cst_30 {dimension_numbers = #tpu.dot_dimension_numbers<[1], [0], [0], [1], [0, 0, 1, 1], [], []>} : vector<32x32xf32>, vector<32x128xf32>, vector<32x128xf32> -> vector<32x128xf32>
    %c3_31 = arith.constant 3 : index
    %c0_32 = arith.constant 0 : index
    %c0_33 = arith.constant 0 : index
    %43 = vector.load %arg3[%c3_31, %c0_32, %c0_33] : memref<7x32x1xf32, #tpu.memory_space<vmem>>, vector<1x32x1xf32>
    %44 = vector.shape_cast %43 : vector<1x32x1xf32> to vector<32x1xf32>
    %45 = vector.broadcast %44 : vector<32x1xf32> to vector<32x128xf32>
    %46 = arith.addf %42, %45 : vector<32x128xf32>
    %47 = math.tanh %46 : vector<32x128xf32>
    %c5 = arith.constant 5 : index
    %c0_34 = arith.constant 0 : index
    %c0_35 = arith.constant 0 : index
    %48 = vector.load %arg2[%c5, %c0_34, %c0_35] : memref<7x32x32xf32, #tpu.memory_space<vmem>>, vector<1x32x32xf32>
    %49 = vector.shape_cast %48 : vector<1x32x32xf32> to vector<32x32xf32>
    %cst_36 = arith.constant dense<0.000000e+00> : vector<32x128xf32>
    %50 = tpu.matmul %49, %47, %cst_36 {dimension_numbers = #tpu.dot_dimension_numbers<[1], [0], [0], [1], [0, 0, 1, 1], [], []>} : vector<32x32xf32>, vector<32x128xf32>, vector<32x128xf32> -> vector<32x128xf32>
    %c4_37 = arith.constant 4 : index
    %c0_38 = arith.constant 0 : index
    %c0_39 = arith.constant 0 : index
    %51 = vector.load %arg3[%c4_37, %c0_38, %c0_39] : memref<7x32x1xf32, #tpu.memory_space<vmem>>, vector<1x32x1xf32>
    %52 = vector.shape_cast %51 : vector<1x32x1xf32> to vector<32x1xf32>
    %53 = vector.broadcast %52 : vector<32x1xf32> to vector<32x128xf32>
    %54 = arith.addf %50, %53 : vector<32x128xf32>
    %55 = math.tanh %54 : vector<32x128xf32>
    %c6_40 = arith.constant 6 : index
    %c0_41 = arith.constant 0 : index
    %c0_42 = arith.constant 0 : index
    %56 = vector.load %arg2[%c6_40, %c0_41, %c0_42] : memref<7x32x32xf32, #tpu.memory_space<vmem>>, vector<1x32x32xf32>
    %57 = vector.shape_cast %56 : vector<1x32x32xf32> to vector<32x32xf32>
    %cst_43 = arith.constant dense<0.000000e+00> : vector<32x128xf32>
    %58 = tpu.matmul %57, %55, %cst_43 {dimension_numbers = #tpu.dot_dimension_numbers<[1], [0], [0], [1], [0, 0, 1, 1], [], []>} : vector<32x32xf32>, vector<32x128xf32>, vector<32x128xf32> -> vector<32x128xf32>
    %c5_44 = arith.constant 5 : index
    %c0_45 = arith.constant 0 : index
    %c0_46 = arith.constant 0 : index
    %59 = vector.load %arg3[%c5_44, %c0_45, %c0_46] : memref<7x32x1xf32, #tpu.memory_space<vmem>>, vector<1x32x1xf32>
    %60 = vector.shape_cast %59 : vector<1x32x1xf32> to vector<32x1xf32>
    %61 = vector.broadcast %60 : vector<32x1xf32> to vector<32x128xf32>
    %62 = arith.addf %58, %61 : vector<32x128xf32>
    %63 = vector.extract_strided_slice %62 {offsets = [0, 0], sizes = [4, 128], strides = [1, 1]} : vector<32x128xf32> to vector<4x128xf32>
    %c0_47 = arith.constant 0 : index
    %c0_48 = arith.constant 0 : index
    %64 = vector.load %arg5[%c0_47, %c0_48] : memref<4x128xf32, #tpu.memory_space<vmem>>, vector<4x128xf32>
    tpu.vector_store %arg5[%c0_47, %c0_48], %63 {strides = array<i32>} : memref<4x128xf32, #tpu.memory_space<vmem>>, vector<4x128xf32>,
    return
  }
  func.func @transform_0(%arg0: i32) -> (i32, i32) {
    %c0_i32 = arith.constant 0 : i32
    %c0_i32_0 = arith.constant 0 : i32
    %c0_i32_1 = arith.constant 0 : i32
    return %c0_i32, %c0_i32_0 : i32, i32
  }
  func.func @transform_1(%arg0: i32) -> (i32, i32, i32) {
    %c0_i32 = arith.constant 0 : i32
    %c0_i32_0 = arith.constant 0 : i32
    %c0_i32_1 = arith.constant 0 : i32
    %c0_i32_2 = arith.constant 0 : i32
    return %c0_i32, %c0_i32_0, %c0_i32_1 : i32, i32, i32
  }
  func.func @transform_2(%arg0: i32) -> (i32, i32, i32) {
    %c0_i32 = arith.constant 0 : i32
    %c0_i32_0 = arith.constant 0 : i32
    %c0_i32_1 = arith.constant 0 : i32
    %c0_i32_2 = arith.constant 0 : i32
    return %c0_i32, %c0_i32_0, %c0_i32_1 : i32, i32, i32
  }
  func.func @transform_3(%arg0: i32) -> (i32, i32) {
    %c0_i32 = arith.constant 0 : i32
    %c0_i32_0 = arith.constant 0 : i32
    return %c0_i32, %arg0 : i32, i32
  }
  func.func @transform_4(%arg0: i32) -> (i32, i32) {
    %c0_i32 = arith.constant 0 : i32
    %c0_i32_0 = arith.constant 0 : i32
    return %c0_i32, %arg0 : i32, i32
  }
}

</mosaic_0001>

<llo_original>
// kernel: tpu_custom_call.1
$region0: #{tpu_custom_call.1}
  #allocation0 [shape = 'u32[]', space=smem, size = 0x4, offset = 0x4, fixed_abs, tag = 'smem constant byte address 0x4 - core index']
  #allocation1 [shape = 'u32[144,128]{1,0:T(1,128)}', space=vmem, size = 0x12000, scoped, tag = 'internal scratch']
  %s0 = inlined_call_operand.vmem [shape: f32[32,8], index: 0, kind: input, shape index: {}]
  %s1 = inlined_call_operand.vmem [shape: f32[7,32,32], index: 1, kind: input, shape index: {}]
  %s2 = inlined_call_operand.vmem [shape: f32[7,32,1], index: 2, kind: input, shape index: {}]
  %s3 = inlined_call_operand.vmem [shape: f32[9,128], index: 3, kind: input, shape index: {}]
  %s4 = inlined_call_operand.hbm [shape: f32[4,128], index: 4, kind: output, shape index: {}]
  %s5 = sld [smem:[#allocation0]]
  $region26: #{tpu_custom_call.1} parent=0
    _
  %s7 = ssub.s32 1, %s5
  %s8 = scalar_select 0, %s7, %s5
  $region1: #{tpu_custom_call.1} parent=0
    #allocation2 [shape = 'u8[2048]{0}', space=vmem, size = 0x800, scoped, tag = 'output window, operand 0, single buffered']
    #allocation3 [shape = 's32[1]{0}', space=sflag, size = 0x4, scoped, tag = 'scoped memory for tpu_custom_call.1']
    %9 = vsyncpa [#allocation3], 0
    // Predicated region
    $region2: #{tpu_custom_call.1} parent=1 // pred_check
      _
    $region3: #{tpu_custom_call.1} parent=1 // pred_check_branch
      %11 = sbr.rel (0) target = $region5
    $region4: #{tpu_custom_call.1} parent=1 // pred_region
      _
    $region5: #{tpu_custom_call.1} parent=1 // pred_fallthru
      _
    // Predicated region
    $region6: #{tpu_custom_call.1} parent=1 // pred_check
      _
    $region7: #{tpu_custom_call.1} parent=1 // pred_check_branch
      %13 = sbr.rel (0) target = $region9
    $region8: #{tpu_custom_call.1} parent=1 // pred_region
      _
    $region9: #{tpu_custom_call.1} parent=1 // pred_fallthru
      _
    // Predicated region
    $region10: #{tpu_custom_call.1} parent=1 // pred_check
      _
    $region11: #{tpu_custom_call.1} parent=1 // pred_check_branch
      %15 = sbr.rel (0) target = $region13
    $region12: #{tpu_custom_call.1} parent=1 // pred_region
      _
    $region13: #{tpu_custom_call.1} parent=1 // pred_fallthru
      _
    // Predicated region
    $region14: #{tpu_custom_call.1} parent=1 // pred_check
      _
    $region15: #{tpu_custom_call.1} parent=1 // pred_check_branch
      %17 = sbr.rel (0) target = $region17
    $region16: #{tpu_custom_call.1} parent=1 // pred_region
      _
    $region17: #{tpu_custom_call.1} parent=1 // pred_fallthru
      _
    %v18 = vld [vmem:[%s3 + $0x8] sm:$0x1]
    %s19 = scalar_lea.vmem %s2, 192
    %v20 = vld [vmem:[%s19] sm:$0xff]
    %v21 = vld [vmem:[%s19 + $0x8] sm:$0xff]
    %v22 = vld [vmem:[%s19 + $0x10] sm:$0xff]
    %v23 = vld [vmem:[%s19 + $0x18] sm:$0xff]
    %25 = vset.pattern.permute.xlu0 0
    %26 = vperm.xlu0 %25, %v20
    %v27 = vpop.permute.xlu0 %26
    %30 = vset.pattern.permute.xlu0 0
    %31 = vperm.xlu0 %30, %v21
    %v32 = vpop.permute.xlu0 %31
    %35 = vset.pattern.permute.xlu0 0
    %36 = vperm.xlu0 %35, %v22
    %v37 = vpop.permute.xlu0 %36
    %40 = vset.pattern.permute.xlu0 0
    %41 = vperm.xlu0 %40, %v23
    %v42 = vpop.permute.xlu0 %41
    %v44 = vlaneseq
    %v45 = vshrl.u32 %v44, 7
    %v46 = vsub.s32 0, %v45
    %v47 = vrot.slane %v18, %v46
    %v48 = vmul.f32 %v27, %v47
    %v49 = vmul.f32 %v32, %v47
    %v50 = vmul.f32 %v37, %v47
    %v51 = vmul.f32 %v42, %v47
    %v52 = vand.u32 2147483647, %v48
    %vm53 = vcmp.le.f32.partialorder %v52, 0.7853982
    %vm54 = vcmp.lt.s32.totalorder %v48, 0
    %v55 = vand.u32 %v48, 2139095040
    %v56 = vshrl.u32 %v55, 23
    %v57 = vsub.s32 %v56, 127
    %v58 = vand.u32 2147483647, %v48
    %v59 = vand.u32 %v58, 8388607
    %v60 = vor.u32 %v59, 8388608
    %v61 = vsub.s32 0, %v60
    %v62 = vadd.s32 %v57, 1
    %vm63 = vcmp.gt.s32.totalorder %v62, 0
    %v64 = vsel %vm63, %v62, 0
    %v65 = vshrl.u32 %v64, 5
    %v66 = vand.u32 %v64, 31
    %v67 = vsub.s32 32, %v66
    %v68 = vshrl.u32 683565275, %v67
    %v69 = vshll.u32 683565275, %v66
    %v70 = vshrl.u32 2475754826, %v67
    %v71 = vor.u32 %v69, %v70
    %v72 = vshll.u32 2475754826, %v66
    %v73 = vshrl.u32 2131351028, %v67
    %v74 = vor.u32 %v72, %v73
    %v75 = vshll.u32 2131351028, %v66
    %v76 = vshrl.u32 2102212464, %v67
    %v77 = vor.u32 %v75, %v76
    %v78 = vshll.u32 2102212464, %v66
    %v79 = vshrl.u32 920167782, %v67
    %v80 = vor.u32 %v78, %v79
    %v81 = vshll.u32 920167782, %v66
    %v82 = vshrl.u32 1326507024, %v67
    %v83 = vor.u32 %v81, %v82
    %vm84 = vcmp.lt.s32.totalorder %v65, 1
    %vm85 = vcmp.lt.s32.totalorder %v65, 2
    %vm86 = vcmp.lt.s32.totalorder %v65, 3
    %vm87 = vcmp.lt.s32.totalorder %v65, 4
    %v88 = vsel %vm84, %v68, %v71
    %v89 = vsel %vm87, %v77, 2102212464
    %v90 = vsel %vm86, %v74, %v89
    %v91 = vsel %vm85, %v88, %v90
    %v92 = vsel %vm84, %v71, %v74
    %v93 = vsel %vm87, %v80, 920167782
    %v94 = vsel %vm86, %v77, %v93
    %v95 = vsel %vm85, %v92, %v94
    %v96 = vsel %vm84, %v74, %v77
    %v97 = vsel %vm87, %v83, 1326507024
    %v98 = vsel %vm86, %v80, %v97
    %v99 = vsel %vm85, %v96, %v98
    %v100 = vshll.u32 %v60, 8
    %v101 = vmul.u32.u64.compose %v100, %v99
    %v102 = vextract.low.u32 %v101
    %v103 = vextract.high.u32 %v101
    %v104 = vmul.u32.u64.compose %v100, %v95
    %v105 = vextract.low.u32 %v104
    %v106 = vextract.high.u32 %v104
    %v107 = vmul.u32 %v100, %v91
    %v108 = vadd.s32 %v103, %v105
    %vm109 = vc.u32 %v103, %v105
    %v110 = vadd.s32 %v106, 1
    %v111 = vsel %vm109, %v110, %v106
    %v112 = vadd.s32 %v107, %v111
    %v113 = vadd.s32 %v112, 536870912
    %v114 = vshrl.u32 %v113, 30
    %v115 = vshll.u32 %v114, 30
    %v116 = vsub.s32 %v112, %v115
    %vm117 = vcmp.lt.s32.totalorder %v116, 0
    %v118 = vsub.s32 0, %v116
    %v119 = vsel %vm117, %v118, %v116
    %v120 = vclz %v119
    %v121 = vsub.s32 %v120, 2
    %vm122 = vcmp.gt.s32.totalorder 0, %v121
    %v123 = vsel %vm122, 0, %v121
    %v124 = vsub.s32 32, %v123
    %v125 = vshll.u32 %v116, %v123
    %v126 = vshrl.u32 %v108, %v124
    %v127 = vor.u32 %v125, %v126
    %v128 = vsub.s32 4294967266, %v123
    %v129 = vadd.s32 %v128, 127
    %v130 = vshll.u32 %v129, 23
    %v131 = vor.u32 4788187, %v130
    %v132 = vand.u32 2147483647, %v131
    %v134 = vcvt.s32.f32 %v127
    %v135 = vmul.f32 %v134, %v132
    %v136 = vxor.u32 %v135, 2147483648
    %v137 = vsel %vm54, %v136, %v135
    %v138 = vsub.s32 4, %v114
    %v139 = vsel %vm54, %v138, %v114
    %v140 = vsel %vm53, %v48, %v137
    %v141 = vsel %vm53, 0, %v139
    %v142 = vcosq.f32.pop %v140
    %v143 = vsinq.f32.pop %v140
    %vm144 = vweird.f32 %v48
    %v145 = vadd.s32 %v141, 3
    %v146 = vand.u32 %v145, 3
    %vm147 = vcmp.lt.s32.totalorder %v146, 2
    %vm148 = vcmp.eq.s32.totalorder %v146, 0
    %v149 = vxor.u32 %v143, 2147483648
    %v150 = vsel %vm148, %v142, %v149
    %vm151 = vcmp.eq.s32.totalorder %v146, 2
    %v152 = vxor.u32 %v142, 2147483648
    %v153 = vsel %vm151, %v152, %v143
    %v154 = vsel %vm147, %v150, %v153
    %v155 = vsel %vm144, nan, %v154
    %v156 = vand.u32 2147483647, %v49
    %vm157 = vcmp.le.f32.partialorder %v156, 0.7853982
    %vm158 = vcmp.lt.s32.totalorder %v49, 0
    %v159 = vand.u32 %v49, 2139095040
    %v160 = vshrl.u32 %v159, 23
    %v161 = vsub.s32 %v160, 127
    %v162 = vand.u32 2147483647, %v49
    %v163 = vand.u32 %v162, 8388607
    %v164 = vor.u32 %v163, 8388608
    %v165 = vsub.s32 0, %v164
    %v166 = vadd.s32 %v161, 1
    %vm167 = vcmp.gt.s32.totalorder %v166, 0
    %v168 = vsel %vm167, %v166, 0
    %v169 = vshrl.u32 %v168, 5
    %v170 = vand.u32 %v168, 31
    %v171 = vsub.s32 32, %v170
    %v172 = vshrl.u32 683565275, %v171
    %v173 = vshll.u32 683565275, %v170
    %v174 = vshrl.u32 2475754826, %v171
    %v175 = vor.u32 %v173, %v174
    %v176 = vshll.u32 2475754826, %v170
    %v177 = vshrl.u32 2131351028, %v171
    %v178 = vor.u32 %v176, %v177
    %v179 = vshll.u32 2131351028, %v170
    %v180 = vshrl.u32 2102212464, %v171
    %v181 = vor.u32 %v179, %v180
    %v182 = vshll.u32 2102212464, %v170
    %v183 = vshrl.u32 920167782, %v171
    %v184 = vor.u32 %v182, %v183
    %v185 = vshll.u32 920167782, %v170
    %v186 = vshrl.u32 1326507024, %v171
    %v187 = vor.u32 %v185, %v186
    %vm188 = vcmp.lt.s32.totalorder %v169, 1
    %vm189 = vcmp.lt.s32.totalorder %v169, 2
    %vm190 = vcmp.lt.s32.totalorder %v169, 3
    %vm191 = vcmp.lt.s32.totalorder %v169, 4
    %v192 = vsel %vm188, %v172, %v175
    %v193 = vsel %vm191, %v181, 2102212464
    %v194 = vsel %vm190, %v178, %v193
    %v195 = vsel %vm189, %v192, %v194
    %v196 = vsel %vm188, %v175, %v178
    %v197 = vsel %vm191, %v184, 920167782
    %v198 = vsel %vm190, %v181, %v197
    %v199 = vsel %vm189, %v196, %v198
    %v200 = vsel %vm188, %v178, %v181
    %v201 = vsel %vm191, %v187, 1326507024
    %v202 = vsel %vm190, %v184, %v201
    %v203 = vsel %vm189, %v200, %v202
    %v204 = vshll.u32 %v164, 8
    %v205 = vmul.u32.u64.compose %v204, %v203
    %v206 = vextract.low.u32 %v205
    %v207 = vextract.high.u32 %v205
    %v208 = vmul.u32.u64.compose %v204, %v199
    %v209 = vextract.low.u32 %v208
    %v210 = vextract.high.u32 %v208
    %v211 = vmul.u32 %v204, %v195
    %v212 = vadd.s32 %v207, %v209
    %vm213 = vc.u32 %v207, %v209
    %v214 = vadd.s32 %v210, 1
    %v215 = vsel %vm213, %v214, %v210
    %v216 = vadd.s32 %v211, %v215
    %v217 = vadd.s32 %v216, 536870912
    %v218 = vshrl.u32 %v217, 30
    %v219 = vshll.u32 %v218, 30
    %v220 = vsub.s32 %v216, %v219
    %vm221 = vcmp.lt.s32.totalorder %v220, 0
    %v222 = vsub.s32 0, %v220
    %v223 = vsel %vm221, %v222, %v220
    %v224 = vclz %v223
    %v225 = vsub.s32 %v224, 2
    %vm226 = vcmp.gt.s32.totalorder 0, %v225
    %v227 = vsel %vm226, 0, %v225
    %v228 = vsub.s32 32, %v227
    %v229 = vshll.u32 %v220, %v227
    %v230 = vshrl.u32 %v212, %v228
    %v231 = vor.u32 %v229, %v230
    %v232 = vsub.s32 4294967266, %v227
    %v233 = vadd.s32 %v232, 127
    %v234 = vshll.u32 %v233, 23
    %v235 = vor.u32 4788187, %v234
    %v236 = vand.u32 2147483647, %v235
    %v238 = vcvt.s32.f32 %v231
    %v239 = vmul.f32 %v238, %v236
    %v240 = vxor.u32 %v239, 2147483648
    %v241 = vsel %vm158, %v240, %v239
    %v242 = vsub.s32 4, %v218
    %v243 = vsel %vm158, %v242, %v218
    %v244 = vsel %vm157, %v49, %v241
    %v245 = vsel %vm157, 0, %v243
    %v246 = vcosq.f32.pop %v244
    %v247 = vsinq.f32.pop %v244
    %vm248 = vweird.f32 %v49
    %v249 = vadd.s32 %v245, 3
    %v250 = vand.u32 %v249, 3
    %vm251 = vcmp.lt.s32.totalorder %v250, 2
    %vm252 = vcmp.eq.s32.totalorder %v250, 0
    %v253 = vxor.u32 %v247, 2147483648
    %v254 = vsel %vm252, %v246, %v253
    %vm255 = vcmp.eq.s32.totalorder %v250, 2
    %v256 = vxor.u32 %v246, 2147483648
    %v257 = vsel %vm255, %v256, %v247
    %v258 = vsel %vm251, %v254, %v257
    %v259 = vsel %vm248, nan, %v258
    %v260 = vand.u32 2147483647, %v50
    %vm261 = vcmp.le.f32.partialorder %v260, 0.7853982
    %vm262 = vcmp.lt.s32.totalorder %v50, 0
    %v263 = vand.u32 %v50, 2139095040
    %v264 = vshrl.u32 %v263, 23
    %v265 = vsub.s32 %v264, 127
    %v266 = vand.u32 2147483647, %v50
    %v267 = vand.u32 %v266, 8388607
    %v268 = vor.u32 %v267, 8388608
    %v269 = vsub.s32 0, %v268
    %v270 = vadd.s32 %v265, 1
    %vm271 = vcmp.gt.s32.totalorder %v270, 0
    %v272 = vsel %vm271, %v270, 0
    %v273 = vshrl.u32 %v272, 5
    %v274 = vand.u32 %v272, 31
    %v275 = vsub.s32 32, %v274
    %v276 = vshrl.u32 683565275, %v275
    %v277 = vshll.u32 683565275, %v274
    %v278 = vshrl.u32 2475754826, %v275
    %v279 = vor.u32 %v277, %v278
    %v280 = vshll.u32 2475754826, %v274
    %v281 = vshrl.u32 2131351028, %v275
    %v282 = vor.u32 %v280, %v281
    %v283 = vshll.u32 2131351028, %v274
    %v284 = vshrl.u32 2102212464, %v275
    %v285 = vor.u32 %v283, %v284
    %v286 = vshll.u32 2102212464, %v274
    %v287 = vshrl.u32 920167782, %v275
    %v288 = vor.u32 %v286, %v287
    %v289 = vshll.u32 920167782, %v274
    %v290 = vshrl.u32 1326507024, %v275
    %v291 = vor.u32 %v289, %v290
    %vm292 = vcmp.lt.s32.totalorder %v273, 1
    %vm293 = vcmp.lt.s32.totalorder %v273, 2
    %vm294 = vcmp.lt.s32.totalorder %v273, 3
    %vm295 = vcmp.lt.s32.totalorder %v273, 4
    %v296 = vsel %vm292, %v276, %v279
    %v297 = vsel %vm295, %v285, 2102212464
    %v298 = vsel %vm294, %v282, %v297
    %v299 = vsel %vm293, %v296, %v298
    %v300 = vsel %vm292, %v279, %v282
    %v301 = vsel %vm295, %v288, 920167782
    %v302 = vsel %vm294, %v285, %v301
    %v303 = vsel %vm293, %v300, %v302
    %v304 = vsel %vm292, %v282, %v285
    %v305 = vsel %vm295, %v291, 1326507024
    %v306 = vsel %vm294, %v288, %v305
    %v307 = vsel %vm293, %v304, %v306
    %v308 = vshll.u32 %v268, 8
    %v309 = vmul.u32.u64.compose %v308, %v307
    %v310 = vextract.low.u32 %v309
    %v311 = vextract.high.u32 %v309
    %v312 = vmul.u32.u64.compose %v308, %v303
    %v313 = vextract.low.u32 %v312
    %v314 = vextract.high.u32 %v312
    %v315 = vmul.u32 %v308, %v299
    %v316 = vadd.s32 %v311, %v313
    %vm317 = vc.u32 %v311, %v313
    %v318 = vadd.s32 %v314, 1
    %v319 = vsel %vm317, %v318, %v314
    %v320 = vadd.s32 %v315, %v319
    %v321 = vadd.s32 %v320, 536870912
    %v322 = vshrl.u32 %v321, 30
    %v323 = vshll.u32 %v322, 30
    %v324 = vsub.s32 %v320, %v323
    %vm325 = vcmp.lt.s32.totalorder %v324, 0
    %v326 = vsub.s32 0, %v324
    %v327 = vsel %vm325, %v326, %v324
    %v328 = vclz %v327
    %v329 = vsub.s32 %v328, 2
    %vm330 = vcmp.gt.s32.totalorder 0, %v329
    %v331 = vsel %vm330, 0, %v329
    %v332 = vsub.s32 32, %v331
    %v333 = vshll.u32 %v324, %v331
    %v334 = vshrl.u32 %v316, %v332
    %v335 = vor.u32 %v333, %v334
    %v336 = vsub.s32 4294967266, %v331
    %v337 = vadd.s32 %v336, 127
    %v338 = vshll.u32 %v337, 23
    %v339 = vor.u32 4788187, %v338
    %v340 = vand.u32 2147483647, %v339
    %v342 = vcvt.s32.f32 %v335
    %v343 = vmul.f32 %v342, %v340
    %v344 = vxor.u32 %v343, 2147483648
    %v345 = vsel %vm262, %v344, %v343
    %v346 = vsub.s32 4, %v322
    %v347 = vsel %vm262, %v346, %v322
    %v348 = vsel %vm261, %v50, %v345
    %v349 = vsel %vm261, 0, %v347
    %v350 = vcosq.f32.pop %v348
    %v351 = vsinq.f32.pop %v348
    %vm352 = vweird.f32 %v50
    %v353 = vadd.s32 %v349, 3
    %v354 = vand.u32 %v353, 3
    %vm355 = vcmp.lt.s32.totalorder %v354, 2
    %vm356 = vcmp.eq.s32.totalorder %v354, 0
    %v357 = vxor.u32 %v351, 2147483648
    %v358 = vsel %vm356, %v350, %v357
    %vm359 = vcmp.eq.s32.totalorder %v354, 2
    %v360 = vxor.u32 %v350, 2147483648
    %v361 = vsel %vm359, %v360, %v351
    %v362 = vsel %vm355, %v358, %v361
    %v363 = vsel %vm352, nan, %v362
    %v364 = vand.u32 2147483647, %v51
    %vm365 = vcmp.le.f32.partialorder %v364, 0.7853982
    %vm366 = vcmp.lt.s32.totalorder %v51, 0
    %v367 = vand.u32 %v51, 2139095040
    %v368 = vshrl.u32 %v367, 23
    %v369 = vsub.s32 %v368, 127
    %v370 = vand.u32 2147483647, %v51
    %v371 = vand.u32 %v370, 8388607
    %v372 = vor.u32 %v371, 8388608
    %v373 = vsub.s32 0, %v372
    %v374 = vadd.s32 %v369, 1
    %vm375 = vcmp.gt.s32.totalorder %v374, 0
    %v376 = vsel %vm375, %v374, 0
    %v377 = vshrl.u32 %v376, 5
    %v378 = vand.u32 %v376, 31
    %v379 = vsub.s32 32, %v378
    %v380 = vshrl.u32 683565275, %v379
    %v381 = vshll.u32 683565275, %v378
    %v382 = vshrl.u32 2475754826, %v379
    %v383 = vor.u32 %v381, %v382
    %v384 = vshll.u32 2475754826, %v378
    %v385 = vshrl.u32 2131351028, %v379
    %v386 = vor.u32 %v384, %v385
    %v387 = vshll.u32 2131351028, %v378
    %v388 = vshrl.u32 2102212464, %v379
    %v389 = vor.u32 %v387, %v388
    %v390 = vshll.u32 2102212464, %v378
    %v391 = vshrl.u32 920167782, %v379
    %v392 = vor.u32 %v390, %v391
    %v393 = vshll.u32 920167782, %v378
    %v394 = vshrl.u32 1326507024, %v379
    %v395 = vor.u32 %v393, %v394
    %vm396 = vcmp.lt.s32.totalorder %v377, 1
    %vm397 = vcmp.lt.s32.totalorder %v377, 2
    %vm398 = vcmp.lt.s32.totalorder %v377, 3
    %vm399 = vcmp.lt.s32.totalorder %v377, 4
    %v400 = vsel %vm396, %v380, %v383
    %v401 = vsel %vm399, %v389, 2102212464
    %v402 = vsel %vm398, %v386, %v401
    %v403 = vsel %vm397, %v400, %v402
    %v404 = vsel %vm396, %v383, %v386
    %v405 = vsel %vm399, %v392, 920167782
    %v406 = vsel %vm398, %v389, %v405
    %v407 = vsel %vm397, %v404, %v406
    %v408 = vsel %vm396, %v386, %v389
    %v409 = vsel %vm399, %v395, 1326507024
    %v410 = vsel %vm398, %v392, %v409
    %v411 = vsel %vm397, %v408, %v410
    %v412 = vshll.u32 %v372, 8
    %v413 = vmul.u32.u64.compose %v412, %v411
    %v414 = vextract.low.u32 %v413
    %v415 = vextract.high.u32 %v413
    %v416 = vmul.u32.u64.compose %v412, %v407
    %v417 = vextract.low.u32 %v416
    %v418 = vextract.high.u32 %v416
    %v419 = vmul.u32 %v412, %v403
    %v420 = vadd.s32 %v415, %v417
    %vm421 = vc.u32 %v415, %v417
    %v422 = vadd.s32 %v418, 1
    %v423 = vsel %vm421, %v422, %v418
    %v424 = vadd.s32 %v419, %v423
    %v425 = vadd.s32 %v424, 536870912
    %v426 = vshrl.u32 %v425, 30
    %v427 = vshll.u32 %v426, 30
    %v428 = vsub.s32 %v424, %v427
    %vm429 = vcmp.lt.s32.totalorder %v428, 0
    %v430 = vsub.s32 0, %v428
    %v431 = vsel %vm429, %v430, %v428
    %v432 = vclz %v431
    %v433 = vsub.s32 %v432, 2
    %vm434 = vcmp.gt.s32.totalorder 0, %v433
    %v435 = vsel %vm434, 0, %v433
    %v436 = vsub.s32 32, %v435
    %v437 = vshll.u32 %v428, %v435
    %v438 = vshrl.u32 %v420, %v436
    %v439 = vor.u32 %v437, %v438
    %v440 = vsub.s32 4294967266, %v435
    %v441 = vadd.s32 %v440, 127
    %v442 = vshll.u32 %v441, 23
    %v443 = vor.u32 4788187, %v442
    %v444 = vand.u32 2147483647, %v443
    %v446 = vcvt.s32.f32 %v439
    %v447 = vmul.f32 %v446, %v444
    %v448 = vxor.u32 %v447, 2147483648
    %v449 = vsel %vm366, %v448, %v447
    %v450 = vsub.s32 4, %v426
    %v451 = vsel %vm366, %v450, %v426
    %v452 = vsel %vm365, %v51, %v449
    %v453 = vsel %vm365, 0, %v451
    %v454 = vcosq.f32.pop %v452
    %v455 = vsinq.f32.pop %v452
    %vm456 = vweird.f32 %v51
    %v457 = vadd.s32 %v453, 3
    %v458 = vand.u32 %v457, 3
    %vm459 = vcmp.lt.s32.totalorder %v458, 2
    %vm460 = vcmp.eq.s32.totalorder %v458, 0
    %v461 = vxor.u32 %v455, 2147483648
    %v462 = vsel %vm460, %v454, %v461
    %vm463 = vcmp.eq.s32.totalorder %v458, 2
    %v464 = vxor.u32 %v454, 2147483648
    %v465 = vsel %vm463, %v464, %v455
    %v466 = vsel %vm459, %v462, %v465
    %v467 = vsel %vm456, nan, %v466
    %v468 = vand.u32 2147483647, %v48
    %vm469 = vcmp.le.f32.partialorder %v468, 0.7853982
    %vm470 = vcmp.lt.s32.totalorder %v48, 0
    %v471 = vand.u32 %v48, 2139095040
    %v472 = vshrl.u32 %v471, 23
    %v473 = vsub.s32 %v472, 127
    %v474 = vand.u32 2147483647, %v48
    %v475 = vand.u32 %v474, 8388607
    %v476 = vor.u32 %v475, 8388608
    %v477 = vsub.s32 0, %v476
    %v478 = vadd.s32 %v473, 1
    %vm479 = vcmp.gt.s32.totalorder %v478, 0
    %v480 = vsel %vm479, %v478, 0
    %v481 = vshrl.u32 %v480, 5
    %v482 = vand.u32 %v480, 31
    %v483 = vsub.s32 32, %v482
    %v484 = vshrl.u32 683565275, %v483
    %v485 = vshll.u32 683565275, %v482
    %v486 = vshrl.u32 2475754826, %v483
    %v487 = vor.u32 %v485, %v486
    %v488 = vshll.u32 2475754826, %v482
    %v489 = vshrl.u32 2131351028, %v483
    %v490 = vor.u32 %v488, %v489
    %v491 = vshll.u32 2131351028, %v482
    %v492 = vshrl.u32 2102212464, %v483
    %v493 = vor.u32 %v491, %v492
    %v494 = vshll.u32 2102212464, %v482
    %v495 = vshrl.u32 920167782, %v483
    %v496 = vor.u32 %v494, %v495
    %v497 = vshll.u32 920167782, %v482
    %v498 = vshrl.u32 1326507024, %v483
    %v499 = vor.u32 %v497, %v498
    %vm500 = vcmp.lt.s32.totalorder %v481, 1
    %vm501 = vcmp.lt.s32.totalorder %v481, 2
    %vm502 = vcmp.lt.s32.totalorder %v481, 3
    %vm503 = vcmp.lt.s32.totalorder %v481, 4
    %v504 = vsel %vm500, %v484, %v487
    %v505 = vsel %vm503, %v493, 2102212464
    %v506 = vsel %vm502, %v490, %v505
    %v507 = vsel %vm501, %v504, %v506
    %v508 = vsel %vm500, %v487, %v490
    %v509 = vsel %vm503, %v496, 920167782
    %v510 = vsel %vm502, %v493, %v509
    %v511 = vsel %vm501, %v508, %v510
    %v512 = vsel %vm500, %v490, %v493
    %v513 = vsel %vm503, %v499, 1326507024
    %v514 = vsel %vm502, %v496, %v513
    %v515 = vsel %vm501, %v512, %v514
    %v516 = vshll.u32 %v476, 8
    %v517 = vmul.u32.u64.compose %v516, %v515
    %v518 = vextract.low.u32 %v517
    %v519 = vextract.high.u32 %v517
    %v520 = vmul.u32.u64.compose %v516, %v511
    %v521 = vextract.low.u32 %v520
    %v522 = vextract.high.u32 %v520
    %v523 = vmul.u32 %v516, %v507
    %v524 = vadd.s32 %v519, %v521
    %vm525 = vc.u32 %v519, %v521
    %v526 = vadd.s32 %v522, 1
    %v527 = vsel %vm525, %v526, %v522
    %v528 = vadd.s32 %v523, %v527
    %v529 = vadd.s32 %v528, 536870912
    %v530 = vshrl.u32 %v529, 30
    %v531 = vshll.u32 %v530, 30
    %v532 = vsub.s32 %v528, %v531
    %vm533 = vcmp.lt.s32.totalorder %v532, 0
    %v534 = vsub.s32 0, %v532
    %v535 = vsel %vm533, %v534, %v532
    %v536 = vclz %v535
    %v537 = vsub.s32 %v536, 2
    %vm538 = vcmp.gt.s32.totalorder 0, %v537
    %v539 = vsel %vm538, 0, %v537
    %v540 = vsub.s32 32, %v539
    %v541 = vshll.u32 %v532, %v539
    %v542 = vshrl.u32 %v524, %v540
    %v543 = vor.u32 %v541, %v542
    %v544 = vsub.s32 4294967266, %v539
    %v545 = vadd.s32 %v544, 127
    %v546 = vshll.u32 %v545, 23
    %v547 = vor.u32 4788187, %v546
    %v548 = vand.u32 2147483647, %v547
    %v550 = vcvt.s32.f32 %v543
    %v551 = vmul.f32 %v550, %v548
    %v552 = vxor.u32 %v551, 2147483648
    %v553 = vsel %vm470, %v552, %v551
    %v554 = vsub.s32 4, %v530
    %v555 = vsel %vm470, %v554, %v530
    %v556 = vsel %vm469, %v48, %v553
    %v557 = vsel %vm469, 0, %v555
    %v558 = vcosq.f32.pop %v556
    %v559 = vsinq.f32.pop %v556
    %vm560 = vweird.f32 %v48
    %v561 = vand.u32 %v557, 3
    %vm562 = vcmp.lt.s32.totalorder %v561, 2
    %vm563 = vcmp.eq.s32.totalorder %v561, 0
    %v564 = vxor.u32 %v559, 2147483648
    %v565 = vsel %vm563, %v558, %v564
    %vm566 = vcmp.eq.s32.totalorder %v561, 2
    %v567 = vxor.u32 %v558, 2147483648
    %v568 = vsel %vm566, %v567, %v559
    %v569 = vsel %vm562, %v565, %v568
    %v570 = vsel %vm560, nan, %v569
    %v571 = vand.u32 2147483647, %v49
    %vm572 = vcmp.le.f32.partialorder %v571, 0.7853982
    %vm573 = vcmp.lt.s32.totalorder %v49, 0
    %v574 = vand.u32 %v49, 2139095040
    %v575 = vshrl.u32 %v574, 23
    %v576 = vsub.s32 %v575, 127
    %v577 = vand.u32 2147483647, %v49
    %v578 = vand.u32 %v577, 8388607
    %v579 = vor.u32 %v578, 8388608
    %v580 = vsub.s32 0, %v579
    %v581 = vadd.s32 %v576, 1
    %vm582 = vcmp.gt.s32.totalorder %v581, 0
    %v583 = vsel %vm582, %v581, 0
    %v584 = vshrl.u32 %v583, 5
    %v585 = vand.u32 %v583, 31
    %v586 = vsub.s32 32, %v585
    %v587 = vshrl.u32 683565275, %v586
    %v588 = vshll.u32 683565275, %v585
    %v589 = vshrl.u32 2475754826, %v586
    %v590 = vor.u32 %v588, %v589
    %v591 = vshll.u32 2475754826, %v585
    %v592 = vshrl.u32 2131351028, %v586
    %v593 = vor.u32 %v591, %v592
    %v594 = vshll.u32 2131351028, %v585
    %v595 = vshrl.u32 2102212464, %v586
    %v596 = vor.u32 %v594, %v595
    %v597 = vshll.u32 2102212464, %v585
    %v598 = vshrl.u32 920167782, %v586
    %v599 = vor.u32 %v597, %v598
    %v600 = vshll.u32 920167782, %v585
    %v601 = vshrl.u32 1326507024, %v586
    %v602 = vor.u32 %v600, %v601
    %vm603 = vcmp.lt.s32.totalorder %v584, 1
    %vm604 = vcmp.lt.s32.totalorder %v584, 2
    %vm605 = vcmp.lt.s32.totalorder %v584, 3
    %vm606 = vcmp.lt.s32.totalorder %v584, 4
    %v607 = vsel %vm603, %v587, %v590
    %v608 = vsel %vm606, %v596, 2102212464
    %v609 = vsel %vm605, %v593, %v608
    %v610 = vsel %vm604, %v607, %v609
    %v611 = vsel %vm603, %v590, %v593
    %v612 = vsel %vm606, %v599, 920167782
    %v613 = vsel %vm605, %v596, %v612
    %v614 = vsel %vm604, %v611, %v613
    %v615 = vsel %vm603, %v593, %v596
    %v616 = vsel %vm606, %v602, 1326507024
    %v617 = vsel %vm605, %v599, %v616
    %v618 = vsel %vm604, %v615, %v617
    %v619 = vshll.u32 %v579, 8
    %v620 = vmul.u32.u64.compose %v619, %v618
    %v621 = vextract.low.u32 %v620
    %v622 = vextract.high.u32 %v620
    %v623 = vmul.u32.u64.compose %v619, %v614
    %v624 = vextract.low.u32 %v623
    %v625 = vextract.high.u32 %v623
    %v626 = vmul.u32 %v619, %v610
    %v627 = vadd.s32 %v622, %v624
    %vm628 = vc.u32 %v622, %v624
    %v629 = vadd.s32 %v625, 1
    %v630 = vsel %vm628, %v629, %v625
    %v631 = vadd.s32 %v626, %v630
    %v632 = vadd.s32 %v631, 536870912
    %v633 = vshrl.u32 %v632, 30
    %v634 = vshll.u32 %v633, 30
    %v635 = vsub.s32 %v631, %v634
    %vm636 = vcmp.lt.s32.totalorder %v635, 0
    %v637 = vsub.s32 0, %v635
    %v638 = vsel %vm636, %v637, %v635
    %v639 = vclz %v638
    %v640 = vsub.s32 %v639, 2
    %vm641 = vcmp.gt.s32.totalorder 0, %v640
    %v642 = vsel %vm641, 0, %v640
    %v643 = vsub.s32 32, %v642
    %v644 = vshll.u32 %v635, %v642
    %v645 = vshrl.u32 %v627, %v643
    %v646 = vor.u32 %v644, %v645
    %v647 = vsub.s32 4294967266, %v642
    %v648 = vadd.s32 %v647, 127
    %v649 = vshll.u32 %v648, 23
    %v650 = vor.u32 4788187, %v649
    %v651 = vand.u32 2147483647, %v650
    %v653 = vcvt.s32.f32 %v646
    %v654 = vmul.f32 %v653, %v651
    %v655 = vxor.u32 %v654, 2147483648
    %v656 = vsel %vm573, %v655, %v654
    %v657 = vsub.s32 4, %v633
    %v658 = vsel %vm573, %v657, %v633
    %v659 = vsel %vm572, %v49, %v656
    %v660 = vsel %vm572, 0, %v658
    %v661 = vcosq.f32.pop %v659
    %v662 = vsinq.f32.pop %v659
    %vm663 = vweird.f32 %v49
    %v664 = vand.u32 %v660, 3
    %vm665 = vcmp.lt.s32.totalorder %v664, 2
    %vm666 = vcmp.eq.s32.totalorder %v664, 0
    %v667 = vxor.u32 %v662, 2147483648
    %v668 = vsel %vm666, %v661, %v667
    %vm669 = vcmp.eq.s32.totalorder %v664, 2
    %v670 = vxor.u32 %v661, 2147483648
    %v671 = vsel %vm669, %v670, %v662
    %v672 = vsel %vm665, %v668, %v671
    %v673 = vsel %vm663, nan, %v672
    %v674 = vand.u32 2147483647, %v50
    %vm675 = vcmp.le.f32.partialorder %v674, 0.7853982
    %vm676 = vcmp.lt.s32.totalorder %v50, 0
    %v677 = vand.u32 %v50, 2139095040
    %v678 = vshrl.u32 %v677, 23
    %v679 = vsub.s32 %v678, 127
    %v680 = vand.u32 2147483647, %v50
    %v681 = vand.u32 %v680, 8388607
    %v682 = vor.u32 %v681, 8388608
    %v683 = vsub.s32 0, %v682
    %v684 = vadd.s32 %v679, 1
    %vm685 = vcmp.gt.s32.totalorder %v684, 0
    %v686 = vsel %vm685, %v684, 0
    %v687 = vshrl.u32 %v686, 5
    %v688 = vand.u32 %v686, 31
    %v689 = vsub.s32 32, %v688
    %v690 = vshrl.u32 683565275, %v689
    %v691 = vshll.u32 683565275, %v688
    %v692 = vshrl.u32 2475754826, %v689
    %v693 = vor.u32 %v691, %v692
    %v694 = vshll.u32 2475754826, %v688
    %v695 = vshrl.u32 2131351028, %v689
    %v696 = vor.u32 %v694, %v695
    %v697 = vshll.u32 2131351028, %v688
    %v698 = vshrl.u32 2102212464, %v689
    %v699 = vor.u32 %v697, %v698
    %v700 = vshll.u32 2102212464, %v688
    %v701 = vshrl.u32 920167782, %v689
    %v702 = vor.u32 %v700, %v701
    %v703 = vshll.u32 920167782, %v688
    %v704 = vshrl.u32 1326507024, %v689
    %v705 = vor.u32 %v703, %v704
    %vm706 = vcmp.lt.s32.totalorder %v687, 1
    %vm707 = vcmp.lt.s32.totalorder %v687, 2
    %vm708 = vcmp.lt.s32.totalorder %v687, 3
    %vm709 = vcmp.lt.s32.totalorder %v687, 4
    %v710 = vsel %vm706, %v690, %v693
    %v711 = vsel %vm709, %v699, 2102212464
    %v712 = vsel %vm708, %v696, %v711
    %v713 = vsel %vm707, %v710, %v712
    %v714 = vsel %vm706, %v693, %v696
    %v715 = vsel %vm709, %v702, 920167782
    %v716 = vsel %vm708, %v699, %v715
    %v717 = vsel %vm707, %v714, %v716
    %v718 = vsel %vm706, %v696, %v699
    %v719 = vsel %vm709, %v705, 1326507024
    %v720 = vsel %vm708, %v702, %v719
    %v721 = vsel %vm707, %v718, %v720
    %v722 = vshll.u32 %v682, 8
    %v723 = vmul.u32.u64.compose %v722, %v721
    %v724 = vextract.low.u32 %v723
    %v725 = vextract.high.u32 %v723
    %v726 = vmul.u32.u64.compose %v722, %v717
    %v727 = vextract.low.u32 %v726
    %v728 = vextract.high.u32 %v726
    %v729 = vmul.u32 %v722, %v713
    %v730 = vadd.s32 %v725, %v727
    %vm731 = vc.u32 %v725, %v727
    %v732 = vadd.s32 %v728, 1
    %v733 = vsel %vm731, %v732, %v728
    %v734 = vadd.s32 %v729, %v733
    %v735 = vadd.s32 %v734, 536870912
    %v736 = vshrl.u32 %v735, 30
    %v737 = vshll.u32 %v736, 30
    %v738 = vsub.s32 %v734, %v737
    %vm739 = vcmp.lt.s32.totalorder %v738, 0
    %v740 = vsub.s32 0, %v738
    %v741 = vsel %vm739, %v740, %v738
    %v742 = vclz %v741
    %v743 = vsub.s32 %v742, 2
    %vm744 = vcmp.gt.s32.totalorder 0, %v743
    %v745 = vsel %vm744, 0, %v743
    %v746 = vsub.s32 32, %v745
    %v747 = vshll.u32 %v738, %v745
    %v748 = vshrl.u32 %v730, %v746
    %v749 = vor.u32 %v747, %v748
    %v750 = vsub.s32 4294967266, %v745
    %v751 = vadd.s32 %v750, 127
    %v752 = vshll.u32 %v751, 23
    %v753 = vor.u32 4788187, %v752
    %v754 = vand.u32 2147483647, %v753
    %v756 = vcvt.s32.f32 %v749
    %v757 = vmul.f32 %v756, %v754
    %v758 = vxor.u32 %v757, 2147483648
    %v759 = vsel %vm676, %v758, %v757
    %v760 = vsub.s32 4, %v736
    %v761 = vsel %vm676, %v760, %v736
    %v762 = vsel %vm675, %v50, %v759
    %v763 = vsel %vm675, 0, %v761
    %v764 = vcosq.f32.pop %v762
    %v765 = vsinq.f32.pop %v762
    %vm766 = vweird.f32 %v50
    %v767 = vand.u32 %v763, 3
    %vm768 = vcmp.lt.s32.totalorder %v767, 2
    %vm769 = vcmp.eq.s32.totalorder %v767, 0
    %v770 = vxor.u32 %v765, 2147483648
    %v771 = vsel %vm769, %v764, %v770
    %vm772 = vcmp.eq.s32.totalorder %v767, 2
    %v773 = vxor.u32 %v764, 2147483648
    %v774 = vsel %vm772, %v773, %v765
    %v775 = vsel %vm768, %v771, %v774
    %v776 = vsel %vm766, nan, %v775
    %v777 = vand.u32 2147483647, %v51
    %vm778 = vcmp.le.f32.partialorder %v777, 0.7853982
    %vm779 = vcmp.lt.s32.totalorder %v51, 0
    %v780 = vand.u32 %v51, 2139095040
    %v781 = vshrl.u32 %v780, 23
    %v782 = vsub.s32 %v781, 127
    %v783 = vand.u32 2147483647, %v51
    %v784 = vand.u32 %v783, 8388607
    %v785 = vor.u32 %v784, 8388608
    %v786 = vsub.s32 0, %v785
    %v787 = vadd.s32 %v782, 1
    %vm788 = vcmp.gt.s32.totalorder %v787, 0
    %v789 = vsel %vm788, %v787, 0
    %v790 = vshrl.u32 %v789, 5
    %v791 = vand.u32 %v789, 31
    %v792 = vsub.s32 32, %v791
    %v793 = vshrl.u32 683565275, %v792
    %v794 = vshll.u32 683565275, %v791
    %v795 = vshrl.u32 2475754826, %v792
    %v796 = vor.u32 %v794, %v795
    %v797 = vshll.u32 2475754826, %v791
    %v798 = vshrl.u32 2131351028, %v792
    %v799 = vor.u32 %v797, %v798
    %v800 = vshll.u32 2131351028, %v791
    %v801 = vshrl.u32 2102212464, %v792
    %v802 = vor.u32 %v800, %v801
    %v803 = vshll.u32 2102212464, %v791
    %v804 = vshrl.u32 920167782, %v792
    %v805 = vor.u32 %v803, %v804
    %v806 = vshll.u32 920167782, %v791
    %v807 = vshrl.u32 1326507024, %v792
    %v808 = vor.u32 %v806, %v807
    %vm809 = vcmp.lt.s32.totalorder %v790, 1
    %vm810 = vcmp.lt.s32.totalorder %v790, 2
    %vm811 = vcmp.lt.s32.totalorder %v790, 3
    %vm812 = vcmp.lt.s32.totalorder %v790, 4
    %v813 = vsel %vm809, %v793, %v796
    %v814 = vsel %vm812, %v802, 2102212464
    %v815 = vsel %vm811, %v799, %v814
    %v816 = vsel %vm810, %v813, %v815
    %v817 = vsel %vm809, %v796, %v799
    %v818 = vsel %vm812, %v805, 920167782
    %v819 = vsel %vm811, %v802, %v818
    %v820 = vsel %vm810, %v817, %v819
    %v821 = vsel %vm809, %v799, %v802
    %v822 = vsel %vm812, %v808, 1326507024
    %v823 = vsel %vm811, %v805, %v822
    %v824 = vsel %vm810, %v821, %v823
    %v825 = vshll.u32 %v785, 8
    %v826 = vmul.u32.u64.compose %v825, %v824
    %v827 = vextract.low.u32 %v826
    %v828 = vextract.high.u32 %v826
    %v829 = vmul.u32.u64.compose %v825, %v820
    %v830 = vextract.low.u32 %v829
    %v831 = vextract.high.u32 %v829
    %v832 = vmul.u32 %v825, %v816
    %v833 = vadd.s32 %v828, %v830
    %vm834 = vc.u32 %v828, %v830
    %v835 = vadd.s32 %v831, 1
    %v836 = vsel %vm834, %v835, %v831
    %v837 = vadd.s32 %v832, %v836
    %v838 = vadd.s32 %v837, 536870912
    %v839 = vshrl.u32 %v838, 30
    %v840 = vshll.u32 %v839, 30
    %v841 = vsub.s32 %v837, %v840
    %vm842 = vcmp.lt.s32.totalorder %v841, 0
    %v843 = vsub.s32 0, %v841
    %v844 = vsel %vm842, %v843, %v841
    %v845 = vclz %v844
    %v846 = vsub.s32 %v845, 2
    %vm847 = vcmp.gt.s32.totalorder 0, %v846
    %v848 = vsel %vm847, 0, %v846
    %v849 = vsub.s32 32, %v848
    %v850 = vshll.u32 %v841, %v848
    %v851 = vshrl.u32 %v833, %v849
    %v852 = vor.u32 %v850, %v851
    %v853 = vsub.s32 4294967266, %v848
    %v854 = vadd.s32 %v853, 127
    %v855 = vshll.u32 %v854, 23
    %v856 = vor.u32 4788187, %v855
    %v857 = vand.u32 2147483647, %v856
    %v859 = vcvt.s32.f32 %v852
    %v860 = vmul.f32 %v859, %v857
    %v861 = vxor.u32 %v860, 2147483648
    %v862 = vsel %vm779, %v861, %v860
    %v863 = vsub.s32 4, %v839
    %v864 = vsel %vm779, %v863, %v839
    %v865 = vsel %vm778, %v51, %v862
    %v866 = vsel %vm778, 0, %v864
    %v867 = vcosq.f32.pop %v865
    %v868 = vsinq.f32.pop %v865
    %vm869 = vweird.f32 %v51
    %v870 = vand.u32 %v866, 3
    %vm871 = vcmp.lt.s32.totalorder %v870, 2
    %vm872 = vcmp.eq.s32.totalorder %v870, 0
    %v873 = vxor.u32 %v868, 2147483648
    %v874 = vsel %vm872, %v867, %v873
    %vm875 = vcmp.eq.s32.totalorder %v870, 2
    %v876 = vxor.u32 %v867, 2147483648
    %v877 = vsel %vm875, %v876, %v868
    %v878 = vsel %vm871, %v874, %v877
    %v879 = vsel %vm869, nan, %v878
    %v880 = vld [vmem:[%s0] sm:$0xff]
    %v881 = vld [vmem:[%s0 + $0x8] sm:$0xff]
    %v882 = vld [vmem:[%s0 + $0x10] sm:$0xff]
    %v883 = vld [vmem:[%s0 + $0x18] sm:$0xff]
    %v884 = vld [vmem:[%s3] sm:$0xff]
    %v885 = vld [vmem:[%s1] sm:$0xff]
    %v886 = vld [vmem:[%s1 + $0x8] sm:$0xff]
    %v887 = vld [vmem:[%s1 + $0x10] sm:$0xff]
    %v888 = vld [vmem:[%s1 + $0x18] sm:$0xff]
    %vm889 = vcmask 261120
    %v891 = vsel %vm889, %v885, 0
    %v894 = vsel %vm889, %v886, 0
    %v897 = vsel %vm889, %v887, 0
    %v900 = vsel %vm889, %v888, 0
    %902 = vmatprep.subr.mxu0 0.0
    %903 = vmatpush1.msra.mxu0 %v155
    %904 = vmatprep.subr.mxu0 0.0
    %905 = vmatpush1.msra.mxu0 %v259
    %906 = vmatprep.subr.mxu0 0.0
    %907 = vmatpush1.msra.mxu0 %v363
    %908 = vmatprep.subr.mxu0 0.0
    %909 = vmatpush1.msra.mxu0 %v467
    %910 = vmatprep.subr.mxu0 0.0
    %911 = vmatpush1.msra.mxu0 0.0
    %912 = vmatprep.subr.mxu0 0.0
    %913 = vmatpush1.msra.mxu0 0.0
    %914 = vmatprep.subr.mxu0 0.0
    %915 = vmatpush1.msra.mxu0 0.0
    %916 = vmatprep.subr.mxu0 0.0
    %917 = vmatpush1.msra.mxu0 0.0
    %918 = vmatprep.subr.mxu0 0.0
    %919 = vmatpush1.msra.mxu0 0.0
    %920 = vmatprep.subr.mxu0 0.0
    %921 = vmatpush1.msra.mxu0 0.0
    %922 = vmatprep.subr.mxu0 0.0
    %923 = vmatpush1.msra.mxu0 0.0
    %924 = vmatprep.subr.mxu0 0.0
    %925 = vmatpush1.msra.mxu0 0.0
    %926 = vmatprep.subr.mxu0 0.0
    %927 = vmatpush1.msra.mxu0 0.0
    %928 = vmatprep.subr.mxu0 0.0
    %929 = vmatpush1.msra.mxu0 0.0
    %930 = vmatprep.subr.mxu0 0.0
    %931 = vmatpush1.msra.mxu0 0.0
    %932 = vmatprep.subr.mxu0 0.0
    %933 = vmatpush1.msra.mxu0 0.0
    %934 = vmatprep.subr.mxu0 0.0
    %935 = vmatpush1.msra.mxu0 0.0
    %936 = vmatprep.subr.mxu0 0.0
    %937 = vmatpush1.msra.mxu0 0.0
    %938 = vmatprep.subr.mxu0 0.0
    %939 = vmatpush1.msra.mxu0 0.0
    %940 = vmatprep.subr.mxu0 0.0
    %941 = vmatpush1.msra.mxu0 0.0
    %942 = vmatprep.subr.mxu0 0.0
    %943 = vmatpush1.msra.mxu0 0.0
    %944 = vmatprep.subr.mxu0 0.0
    %945 = vmatpush1.msra.mxu0 0.0
    %946 = vmatprep.subr.mxu0 0.0
    %947 = vmatpush1.msra.mxu0 0.0
    %948 = vmatprep.subr.mxu0 0.0
    %949 = vmatpush1.msra.mxu0 0.0
    %950 = vmatprep.subr.mxu0 0.0
    %951 = vmatpush1.msra.mxu0 0.0
    %952 = vmatprep.subr.mxu0 0.0
    %953 = vmatpush1.msra.mxu0 0.0
    %954 = vmatprep.subr.mxu0 0.0
    %955 = vmatpush1.msra.mxu0 0.0
    %956 = vmatprep.subr.mxu0 0.0
    %957 = vmatpush1.msra.mxu0 0.0
    %958 = vmatprep.subr.mxu0 0.0
    %959 = vmatpush1.msra.mxu0 0.0
    %960 = vmatprep.subr.mxu0 0.0
    %961 = vmatpush1.msra.mxu0 0.0
    %962 = vmatprep.subr.mxu0 0.0
    %963 = vmatpush1.msra.mxu0 0.0
    %964 = vmatprep.subr.mxu0 0.0
    %965 = vmatpush1.msra.mxu0 0.0
    %966 = vmatprep.mubr.f32.mxu0 0.0
    %967 = vmatmul.mubr.f32.gmra.mrb[0].mxu0 %v891
    %v968 = vpop.f32.mrb[0].mxu0
    %v969 = vadd.f32 0.0, %v968
    %v970 = vpop.f32.mrb[0].mxu0
    %971 = vmatprep.mubr.f32.mxu0 0.0
    %972 = vmatmul.mubr.f32.gmra.mrb[0].mxu0 %v894
    %v973 = vpop.f32.mrb[0].mxu0
    %v974 = vadd.f32 0.0, %v973
    %v975 = vpop.f32.mrb[0].mxu0
    %976 = vmatprep.mubr.f32.mxu0 0.0
    %977 = vmatmul.mubr.f32.gmra.mrb[0].mxu0 %v897
    %v978 = vpop.f32.mrb[0].mxu0
    %v979 = vadd.f32 0.0, %v978
    %v980 = vpop.f32.mrb[0].mxu0
    %981 = vmatprep.mubr.f32.mxu0 0.0
    %982 = vmatmul.mubr.f32.gmra.mrb[0].mxu0 %v900
    %v983 = vpop.f32.mrb[0].mxu0
    %v984 = vadd.f32 0.0, %v983
    %v985 = vpop.f32.mrb[0].mxu0
    %986 = vdwg.mxu0
    %vm987 = vcmask 64512
    %v989 = vsel %vm987, %v880, 0
    %v992 = vsel %vm987, %v881, 0
    %v995 = vsel %vm987, %v882, 0
    %v998 = vsel %vm987, %v883, 0
    %1000 = vmatprep.subr.mxu0 0.0
    %1001 = vmatpush1.msra.mxu0 %v884
    %1002 = vmatprep.subr.mxu0 0.0
    %1003 = vmatpush1.msra.mxu0 0.0
    %1004 = vmatprep.subr.mxu0 0.0
    %1005 = vmatpush1.msra.mxu0 0.0
    %1006 = vmatprep.subr.mxu0 0.0
    %1007 = vmatpush1.msra.mxu0 0.0
    %1008 = vmatprep.subr.mxu0 0.0
    %1009 = vmatpush1.msra.mxu0 0.0
    %1010 = vmatprep.subr.mxu0 0.0
    %1011 = vmatpush1.msra.mxu0 0.0
    %1012 = vmatprep.subr.mxu0 0.0
    %1013 = vmatpush1.msra.mxu0 0.0
    %1014 = vmatprep.subr.mxu0 0.0
    %1015 = vmatpush1.msra.mxu0 0.0
    %1016 = vmatprep.subr.mxu0 0.0
    %1017 = vmatpush1.msra.mxu0 0.0
    %1018 = vmatprep.subr.mxu0 0.0
    %1019 = vmatpush1.msra.mxu0 0.0
    %1020 = vmatprep.subr.mxu0 0.0
    %1021 = vmatpush1.msra.mxu0 0.0
    %1022 = vmatprep.subr.mxu0 0.0
    %1023 = vmatpush1.msra.mxu0 0.0
    %1024 = vmatprep.subr.mxu0 0.0
    %1025 = vmatpush1.msra.mxu0 0.0
    %1026 = vmatprep.subr.mxu0 0.0
    %1027 = vmatpush1.msra.mxu0 0.0
    %1028 = vmatprep.subr.mxu0 0.0
    %1029 = vmatpush1.msra.mxu0 0.0
    %1030 = vmatprep.subr.mxu0 0.0
    %1031 = vmatpush1.msra.mxu0 0.0
    %1032 = vmatprep.subr.mxu0 0.0
    %1033 = vmatpush1.msra.mxu0 0.0
    %1034 = vmatprep.subr.mxu0 0.0
    %1035 = vmatpush1.msra.mxu0 0.0
    %1036 = vmatprep.subr.mxu0 0.0
    %1037 = vmatpush1.msra.mxu0 0.0
    %1038 = vmatprep.subr.mxu0 0.0
    %1039 = vmatpush1.msra.mxu0 0.0
    %1040 = vmatprep.subr.mxu0 0.0
    %1041 = vmatpush1.msra.mxu0 0.0
    %1042 = vmatprep.subr.mxu0 0.0
    %1043 = vmatpush1.msra.mxu0 0.0
    %1044 = vmatprep.subr.mxu0 0.0
    %1045 = vmatpush1.msra.mxu0 0.0
    %1046 = vmatprep.subr.mxu0 0.0
    %1047 = vmatpush1.msra.mxu0 0.0
    %1048 = vmatprep.subr.mxu0 0.0
    %1049 = vmatpush1.msra.mxu0 0.0
    %1050 = vmatprep.subr.mxu0 0.0
    %1051 = vmatpush1.msra.mxu0 0.0
    %1052 = vmatprep.subr.mxu0 0.0
    %1053 = vmatpush1.msra.mxu0 0.0
    %1054 = vmatprep.subr.mxu0 0.0
    %1055 = vmatpush1.msra.mxu0 0.0
    %1056 = vmatprep.subr.mxu0 0.0
    %1057 = vmatpush1.msra.mxu0 0.0
    %1058 = vmatprep.subr.mxu0 0.0
    %1059 = vmatpush1.msra.mxu0 0.0
    %1060 = vmatprep.subr.mxu0 0.0
    %1061 = vmatpush1.msra.mxu0 0.0
    %1062 = vmatprep.subr.mxu0 0.0
    %1063 = vmatpush1.msra.mxu0 0.0
    %1064 = vmatprep.mubr.f32.mxu0 0.0
    %1065 = vmatmul.mubr.f32.gmra.mrb[0].mxu0 %v989
    %v1066 = vpop.f32.mrb[0].mxu0
    %v1067 = vadd.f32 %v969, %v1066
    %v1068 = vpop.f32.mrb[0].mxu0
    %1069 = vmatprep.mubr.f32.mxu0 0.0
    %1070 = vmatmul.mubr.f32.gmra.mrb[0].mxu0 %v992
    %v1071 = vpop.f32.mrb[0].mxu0
    %v1072 = vadd.f32 %v974, %v1071
    %v1073 = vpop.f32.mrb[0].mxu0
    %1074 = vmatprep.mubr.f32.mxu0 0.0
    %1075 = vmatmul.mubr.f32.gmra.mrb[0].mxu0 %v995
    %v1076 = vpop.f32.mrb[0].mxu0
    %v1077 = vadd.f32 %v979, %v1076
    %v1078 = vpop.f32.mrb[0].mxu0
    %1079 = vmatprep.mubr.f32.mxu0 0.0
    %1080 = vmatmul.mubr.f32.gmra.mrb[0].mxu0 %v998
    %v1081 = vpop.f32.mrb[0].mxu0
    %v1082 = vadd.f32 %v984, %v1081
    %v1083 = vpop.f32.mrb[0].mxu0
    %1084 = vdwg.mxu0
    %s1085 = scalar_lea.vmem %s1, 32
    %v1086 = vld [vmem:[%s1085] sm:$0xff]
    %v1087 = vld [vmem:[%s1085 + $0x8] sm:$0xff]
    %v1088 = vld [vmem:[%s1085 + $0x10] sm:$0xff]
    %v1089 = vld [vmem:[%s1085 + $0x18] sm:$0xff]
    %v1091 = vsel %vm889, %v1086, 0
    %v1094 = vsel %vm889, %v1087, 0
    %v1097 = vsel %vm889, %v1088, 0
    %v1100 = vsel %vm889, %v1089, 0
    %1102 = vmatprep.subr.mxu0 0.0
    %1103 = vmatpush1.msra.mxu0 %v570
    %1104 = vmatprep.subr.mxu0 0.0
    %1105 = vmatpush1.msra.mxu0 %v673
    %1106 = vmatprep.subr.mxu0 0.0
    %1107 = vmatpush1.msra.mxu0 %v776
    %1108 = vmatprep.subr.mxu0 0.0
    %1109 = vmatpush1.msra.mxu0 %v879
    %1110 = vmatprep.subr.mxu0 0.0
    %1111 = vmatpush1.msra.mxu0 0.0
    %1112 = vmatprep.subr.mxu0 0.0
    %1113 = vmatpush1.msra.mxu0 0.0
    %1114 = vmatprep.subr.mxu0 0.0
    %1115 = vmatpush1.msra.mxu0 0.0
    %1116 = vmatprep.subr.mxu0 0.0
    %1117 = vmatpush1.msra.mxu0 0.0
    %1118 = vmatprep.subr.mxu0 0.0
    %1119 = vmatpush1.msra.mxu0 0.0
    %1120 = vmatprep.subr.mxu0 0.0
    %1121 = vmatpush1.msra.mxu0 0.0
    %1122 = vmatprep.subr.mxu0 0.0
    %1123 = vmatpush1.msra.mxu0 0.0
    %1124 = vmatprep.subr.mxu0 0.0
    %1125 = vmatpush1.msra.mxu0 0.0
    %1126 = vmatprep.subr.mxu0 0.0
    %1127 = vmatpush1.msra.mxu0 0.0
    %1128 = vmatprep.subr.mxu0 0.0
    %1129 = vmatpush1.msra.mxu0 0.0
    %1130 = vmatprep.subr.mxu0 0.0
    %1131 = vmatpush1.msra.mxu0 0.0
    %1132 = vmatprep.subr.mxu0 0.0
    %1133 = vmatpush1.msra.mxu0 0.0
    %1134 = vmatprep.subr.mxu0 0.0
    %1135 = vmatpush1.msra.mxu0 0.0
    %1136 = vmatprep.subr.mxu0 0.0
    %1137 = vmatpush1.msra.mxu0 0.0
    %1138 = vmatprep.subr.mxu0 0.0
    %1139 = vmatpush1.msra.mxu0 0.0
    %1140 = vmatprep.subr.mxu0 0.0
    %1141 = vmatpush1.msra.mxu0 0.0
    %1142 = vmatprep.subr.mxu0 0.0
    %1143 = vmatpush1.msra.mxu0 0.0
    %1144 = vmatprep.subr.mxu0 0.0
    %1145 = vmatpush1.msra.mxu0 0.0
    %1146 = vmatprep.subr.mxu0 0.0
    %1147 = vmatpush1.msra.mxu0 0.0
    %1148 = vmatprep.subr.mxu0 0.0
    %1149 = vmatpush1.msra.mxu0 0.0
    %1150 = vmatprep.subr.mxu0 0.0
    %1151 = vmatpush1.msra.mxu0 0.0
    %1152 = vmatprep.subr.mxu0 0.0
    %1153 = vmatpush1.msra.mxu0 0.0
    %1154 = vmatprep.subr.mxu0 0.0
    %1155 = vmatpush1.msra.mxu0 0.0
    %1156 = vmatprep.subr.mxu0 0.0
    %1157 = vmatpush1.msra.mxu0 0.0
    %1158 = vmatprep.subr.mxu0 0.0
    %1159 = vmatpush1.msra.mxu0 0.0
    %1160 = vmatprep.subr.mxu0 0.0
    %1161 = vmatpush1.msra.mxu0 0.0
    %1162 = vmatprep.subr.mxu0 0.0
    %1163 = vmatpush1.msra.mxu0 0.0
    %1164 = vmatprep.subr.mxu0 0.0
    %1165 = vmatpush1.msra.mxu0 0.0
    %1166 = vmatprep.mubr.f32.mxu0 0.0
    %1167 = vmatmul.mubr.f32.gmra.mrb[0].mxu0 %v1091
    %v1168 = vpop.f32.mrb[0].mxu0
    %v1169 = vadd.f32 0.0, %v1168
    %v1170 = vpop.f32.mrb[0].mxu0
    %1171 = vmatprep.mubr.f32.mxu0 0.0
    %1172 = vmatmul.mubr.f32.gmra.mrb[0].mxu0 %v1094
    %v1173 = vpop.f32.mrb[0].mxu0
    %v1174 = vadd.f32 0.0, %v1173
    %v1175 = vpop.f32.mrb[0].mxu0
    %1176 = vmatprep.mubr.f32.mxu0 0.0
    %1177 = vmatmul.mubr.f32.gmra.mrb[0].mxu0 %v1097
    %v1178 = vpop.f32.mrb[0].mxu0
    %v1179 = vadd.f32 0.0, %v1178
    %v1180 = vpop.f32.mrb[0].mxu0
    %1181 = vmatprep.mubr.f32.mxu0 0.0
    %1182 = vmatmul.mubr.f32.gmra.mrb[0].mxu0 %v1100
    %v1183 = vpop.f32.mrb[0].mxu0
    %v1184 = vadd.f32 0.0, %v1183
    %v1185 = vpop.f32.mrb[0].mxu0
    %1186 = vdwg.mxu0
    %v1187 = vadd.f32 %v1067, %v1169
    %v1188 = vadd.f32 %v1072, %v1174
    %v1189 = vadd.f32 %v1077, %v1179
    %v1190 = vadd.f32 %v1082, %v1184
    %v1191 = vld [vmem:[%s2] sm:$0xff]
    %v1192 = vld [vmem:[%s2 + $0x8] sm:$0xff]
    %v1193 = vld [vmem:[%s2 + $0x10] sm:$0xff]
    %v1194 = vld [vmem:[%s2 + $0x18] sm:$0xff]
    %1196 = vset.pattern.permute.xlu0 0
    %1197 = vperm.xlu0 %1196, %v1191
    %v1198 = vpop.permute.xlu0 %1197
    %1201 = vset.pattern.permute.xlu0 0
    %1202 = vperm.xlu0 %1201, %v1192
    %v1203 = vpop.permute.xlu0 %1202
    %1206 = vset.pattern.permute.xlu0 0
    %1207 = vperm.xlu0 %1206, %v1193
    %v1208 = vpop.permute.xlu0 %1207
    %1211 = vset.pattern.permute.xlu0 0
    %1212 = vperm.xlu0 %1211, %v1194
    %v1213 = vpop.permute.xlu0 %1212
    %v1215 = vadd.f32 %v1187, %v1198
    %v1216 = vadd.f32 %v1188, %v1203
    %v1217 = vadd.f32 %v1189, %v1208
    %v1218 = vadd.f32 %v1190, %v1213
    %v1219 = vtanh.pop %v1215
    %v1220 = vtanh.pop %v1216
    %v1221 = vtanh.pop %v1217
    %v1222 = vtanh.pop %v1218
    %s1223 = scalar_lea.vmem %s1, 64
    %v1224 = vld [vmem:[%s1223] sm:$0xff]
    %v1225 = vld [vmem:[%s1223 + $0x8] sm:$0xff]
    %v1226 = vld [vmem:[%s1223 + $0x10] sm:$0xff]
    %v1227 = vld [vmem:[%s1223 + $0x18] sm:$0xff]
    %s1228 = scalar_lea.vmem %s2, 32
    %v1229 = vld [vmem:[%s1228] sm:$0xff]
    %v1230 = vld [vmem:[%s1228 + $0x8] sm:$0xff]
    %v1231 = vld [vmem:[%s1228 + $0x10] sm:$0xff]
    %v1232 = vld [vmem:[%s1228 + $0x18] sm:$0xff]
    %1234 = vset.pattern.permute.xlu0 0
    %1235 = vperm.xlu0 %1234, %v1229
    %v1236 = vpop.permute.xlu0 %1235
    %1239 = vset.pattern.permute.xlu0 0
    %1240 = vperm.xlu0 %1239, %v1230
    %v1241 = vpop.permute.xlu0 %1240
    %1244 = vset.pattern.permute.xlu0 0
    %1245 = vperm.xlu0 %1244, %v1231
    %v1246 = vpop.permute.xlu0 %1245
    %1249 = vset.pattern.permute.xlu0 0
    %1250 = vperm.xlu0 %1249, %v1232
    %v1251 = vpop.permute.xlu0 %1250
    %v1254 = vsel %vm889, %v1224, 0
    %v1257 = vsel %vm889, %v1225, 0
    %v1260 = vsel %vm889, %v1226, 0
    %v1263 = vsel %vm889, %v1227, 0
    %1265 = vmatprep.subr.mxu0 0.0
    %1266 = vmatpush1.msra.mxu0 %v1219
    %1267 = vmatprep.subr.mxu0 0.0
    %1268 = vmatpush1.msra.mxu0 %v1220
    %1269 = vmatprep.subr.mxu0 0.0
    %1270 = vmatpush1.msra.mxu0 %v1221
    %1271 = vmatprep.subr.mxu0 0.0
    %1272 = vmatpush1.msra.mxu0 %v1222
    %1273 = vmatprep.subr.mxu0 0.0
    %1274 = vmatpush1.msra.mxu0 0.0
    %1275 = vmatprep.subr.mxu0 0.0
    %1276 = vmatpush1.msra.mxu0 0.0
    %1277 = vmatprep.subr.mxu0 0.0
    %1278 = vmatpush1.msra.mxu0 0.0
    %1279 = vmatprep.subr.mxu0 0.0
    %1280 = vmatpush1.msra.mxu0 0.0
    %1281 = vmatprep.subr.mxu0 0.0
    %1282 = vmatpush1.msra.mxu0 0.0
    %1283 = vmatprep.subr.mxu0 0.0
    %1284 = vmatpush1.msra.mxu0 0.0
    %1285 = vmatprep.subr.mxu0 0.0
    %1286 = vmatpush1.msra.mxu0 0.0
    %1287 = vmatprep.subr.mxu0 0.0
    %1288 = vmatpush1.msra.mxu0 0.0
    %1289 = vmatprep.subr.mxu0 0.0
    %1290 = vmatpush1.msra.mxu0 0.0
    %1291 = vmatprep.subr.mxu0 0.0
    %1292 = vmatpush1.msra.mxu0 0.0
    %1293 = vmatprep.subr.mxu0 0.0
    %1294 = vmatpush1.msra.mxu0 0.0
    %1295 = vmatprep.subr.mxu0 0.0
    %1296 = vmatpush1.msra.mxu0 0.0
    %1297 = vmatprep.subr.mxu0 0.0
    %1298 = vmatpush1.msra.mxu0 0.0
    %1299 = vmatprep.subr.mxu0 0.0
    %1300 = vmatpush1.msra.mxu0 0.0
    %1301 = vmatprep.subr.mxu0 0.0
    %1302 = vmatpush1.msra.mxu0 0.0
    %1303 = vmatprep.subr.mxu0 0.0
    %1304 = vmatpush1.msra.mxu0 0.0
    %1305 = vmatprep.subr.mxu0 0.0
    %1306 = vmatpush1.msra.mxu0 0.0
    %1307 = vmatprep.subr.mxu0 0.0
    %1308 = vmatpush1.msra.mxu0 0.0
    %1309 = vmatprep.subr.mxu0 0.0
    %1310 = vmatpush1.msra.mxu0 0.0
    %1311 = vmatprep.subr.mxu0 0.0
    %1312 = vmatpush1.msra.mxu0 0.0
    %1313 = vmatprep.subr.mxu0 0.0
    %1314 = vmatpush1.msra.mxu0 0.0
    %1315 = vmatprep.subr.mxu0 0.0
    %1316 = vmatpush1.msra.mxu0 0.0
    %1317 = vmatprep.subr.mxu0 0.0
    %1318 = vmatpush1.msra.mxu0 0.0
    %1319 = vmatprep.subr.mxu0 0.0
    %1320 = vmatpush1.msra.mxu0 0.0
    %1321 = vmatprep.subr.mxu0 0.0
    %1322 = vmatpush1.msra.mxu0 0.0
    %1323 = vmatprep.subr.mxu0 0.0
    %1324 = vmatpush1.msra.mxu0 0.0
    %1325 = vmatprep.subr.mxu0 0.0
    %1326 = vmatpush1.msra.mxu0 0.0
    %1327 = vmatprep.subr.mxu0 0.0
    %1328 = vmatpush1.msra.mxu0 0.0
    %1329 = vmatprep.mubr.f32.mxu0 0.0
    %1330 = vmatmul.mubr.f32.gmra.mrb[0].mxu0 %v1254
    %v1331 = vpop.f32.mrb[0].mxu0
    %v1332 = vadd.f32 %v1236, %v1331
    %v1333 = vpop.f32.mrb[0].mxu0
    %1334 = vmatprep.mubr.f32.mxu0 0.0
    %1335 = vmatmul.mubr.f32.gmra.mrb[0].mxu0 %v1257
    %v1336 = vpop.f32.mrb[0].mxu0
    %v1337 = vadd.f32 %v1241, %v1336
    %v1338 = vpop.f32.mrb[0].mxu0
    %1339 = vmatprep.mubr.f32.mxu0 0.0
    %1340 = vmatmul.mubr.f32.gmra.mrb[0].mxu0 %v1260
    %v1341 = vpop.f32.mrb[0].mxu0
    %v1342 = vadd.f32 %v1246, %v1341
    %v1343 = vpop.f32.mrb[0].mxu0
    %1344 = vmatprep.mubr.f32.mxu0 0.0
    %1345 = vmatmul.mubr.f32.gmra.mrb[0].mxu0 %v1263
    %v1346 = vpop.f32.mrb[0].mxu0
    %v1347 = vadd.f32 %v1251, %v1346
    %v1348 = vpop.f32.mrb[0].mxu0
    %1349 = vdwg.mxu0
    %v1350 = vtanh.pop %v1332
    %v1351 = vtanh.pop %v1337
    %v1352 = vtanh.pop %v1342
    %v1353 = vtanh.pop %v1347
    %s1354 = scalar_lea.vmem %s1, 96
    %v1355 = vld [vmem:[%s1354] sm:$0xff]
    %v1356 = vld [vmem:[%s1354 + $0x8] sm:$0xff]
    %v1357 = vld [vmem:[%s1354 + $0x10] sm:$0xff]
    %v1358 = vld [vmem:[%s1354 + $0x18] sm:$0xff]
    %s1359 = scalar_lea.vmem %s2, 64
    %v1360 = vld [vmem:[%s1359] sm:$0xff]
    %v1361 = vld [vmem:[%s1359 + $0x8] sm:$0xff]
    %v1362 = vld [vmem:[%s1359 + $0x10] sm:$0xff]
    %v1363 = vld [vmem:[%s1359 + $0x18] sm:$0xff]
    %1365 = vset.pattern.permute.xlu0 0
    %1366 = vperm.xlu0 %1365, %v1360
    %v1367 = vpop.permute.xlu0 %1366
    %1370 = vset.pattern.permute.xlu0 0
    %1371 = vperm.xlu0 %1370, %v1361
    %v1372 = vpop.permute.xlu0 %1371
    %1375 = vset.pattern.permute.xlu0 0
    %1376 = vperm.xlu0 %1375, %v1362
    %v1377 = vpop.permute.xlu0 %1376
    %1380 = vset.pattern.permute.xlu0 0
    %1381 = vperm.xlu0 %1380, %v1363
    %v1382 = vpop.permute.xlu0 %1381
    %v1385 = vsel %vm889, %v1355, 0
    %v1388 = vsel %vm889, %v1356, 0
    %v1391 = vsel %vm889, %v1357, 0
    %v1394 = vsel %vm889, %v1358, 0
    %1396 = vmatprep.subr.mxu0 0.0
    %1397 = vmatpush1.msra.mxu0 %v1350
    %1398 = vmatprep.subr.mxu0 0.0
    %1399 = vmatpush1.msra.mxu0 %v1351
    %1400 = vmatprep.subr.mxu0 0.0
    %1401 = vmatpush1.msra.mxu0 %v1352
    %1402 = vmatprep.subr.mxu0 0.0
    %1403 = vmatpush1.msra.mxu0 %v1353
    %1404 = vmatprep.subr.mxu0 0.0
    %1405 = vmatpush1.msra.mxu0 0.0
    %1406 = vmatprep.subr.mxu0 0.0
    %1407 = vmatpush1.msra.mxu0 0.0
    %1408 = vmatprep.subr.mxu0 0.0
    %1409 = vmatpush1.msra.mxu0 0.0
    %1410 = vmatprep.subr.mxu0 0.0
    %1411 = vmatpush1.msra.mxu0 0.0
    %1412 = vmatprep.subr.mxu0 0.0
    %1413 = vmatpush1.msra.mxu0 0.0
    %1414 = vmatprep.subr.mxu0 0.0
    %1415 = vmatpush1.msra.mxu0 0.0
    %1416 = vmatprep.subr.mxu0 0.0
    %1417 = vmatpush1.msra.mxu0 0.0
    %1418 = vmatprep.subr.mxu0 0.0
    %1419 = vmatpush1.msra.mxu0 0.0
    %1420 = vmatprep.subr.mxu0 0.0
    %1421 = vmatpush1.msra.mxu0 0.0
    %1422 = vmatprep.subr.mxu0 0.0
    %1423 = vmatpush1.msra.mxu0 0.0
    %1424 = vmatprep.subr.mxu0 0.0
    %1425 = vmatpush1.msra.mxu0 0.0
    %1426 = vmatprep.subr.mxu0 0.0
    %1427 = vmatpush1.msra.mxu0 0.0
    %1428 = vmatprep.subr.mxu0 0.0
    %1429 = vmatpush1.msra.mxu0 0.0
    %1430 = vmatprep.subr.mxu0 0.0
    %1431 = vmatpush1.msra.mxu0 0.0
    %1432 = vmatprep.subr.mxu0 0.0
    %1433 = vmatpush1.msra.mxu0 0.0
    %1434 = vmatprep.subr.mxu0 0.0
    %1435 = vmatpush1.msra.mxu0 0.0
    %1436 = vmatprep.subr.mxu0 0.0
    %1437 = vmatpush1.msra.mxu0 0.0
    %1438 = vmatprep.subr.mxu0 0.0
    %1439 = vmatpush1.msra.mxu0 0.0
    %1440 = vmatprep.subr.mxu0 0.0
    %1441 = vmatpush1.msra.mxu0 0.0
    %1442 = vmatprep.subr.mxu0 0.0
    %1443 = vmatpush1.msra.mxu0 0.0
    %1444 = vmatprep.subr.mxu0 0.0
    %1445 = vmatpush1.msra.mxu0 0.0
    %1446 = vmatprep.subr.mxu0 0.0
    %1447 = vmatpush1.msra.mxu0 0.0
    %1448 = vmatprep.subr.mxu0 0.0
    %1449 = vmatpush1.msra.mxu0 0.0
    %1450 = vmatprep.subr.mxu0 0.0
    %1451 = vmatpush1.msra.mxu0 0.0
    %1452 = vmatprep.subr.mxu0 0.0
    %1453 = vmatpush1.msra.mxu0 0.0
    %1454 = vmatprep.subr.mxu0 0.0
    %1455 = vmatpush1.msra.mxu0 0.0
    %1456 = vmatprep.subr.mxu0 0.0
    %1457 = vmatpush1.msra.mxu0 0.0
    %1458 = vmatprep.subr.mxu0 0.0
    %1459 = vmatpush1.msra.mxu0 0.0
    %1460 = vmatprep.mubr.f32.mxu0 0.0
    %1461 = vmatmul.mubr.f32.gmra.mrb[0].mxu0 %v1385
    %v1462 = vpop.f32.mrb[0].mxu0
    %v1463 = vadd.f32 %v1367, %v1462
    %v1464 = vpop.f32.mrb[0].mxu0
    %1465 = vmatprep.mubr.f32.mxu0 0.0
    %1466 = vmatmul.mubr.f32.gmra.mrb[0].mxu0 %v1388
    %v1467 = vpop.f32.mrb[0].mxu0
    %v1468 = vadd.f32 %v1372, %v1467
    %v1469 = vpop.f32.mrb[0].mxu0
    %1470 = vmatprep.mubr.f32.mxu0 0.0
    %1471 = vmatmul.mubr.f32.gmra.mrb[0].mxu0 %v1391
    %v1472 = vpop.f32.mrb[0].mxu0
    %v1473 = vadd.f32 %v1377, %v1472
    %v1474 = vpop.f32.mrb[0].mxu0
    %1475 = vmatprep.mubr.f32.mxu0 0.0
    %1476 = vmatmul.mubr.f32.gmra.mrb[0].mxu0 %v1394
    %v1477 = vpop.f32.mrb[0].mxu0
    %v1478 = vadd.f32 %v1382, %v1477
    %v1479 = vpop.f32.mrb[0].mxu0
    %1480 = vdwg.mxu0
    %v1481 = vtanh.pop %v1463
    %v1482 = vtanh.pop %v1468
    %v1483 = vtanh.pop %v1473
    %v1484 = vtanh.pop %v1478
    %s1485 = scalar_lea.vmem %s1, 128
    %v1486 = vld [vmem:[%s1485] sm:$0xff]
    %v1487 = vld [vmem:[%s1485 + $0x8] sm:$0xff]
    %v1488 = vld [vmem:[%s1485 + $0x10] sm:$0xff]
    %v1489 = vld [vmem:[%s1485 + $0x18] sm:$0xff]
    %s1490 = scalar_lea.vmem %s2, 96
    %v1491 = vld [vmem:[%s1490] sm:$0xff]
    %v1492 = vld [vmem:[%s1490 + $0x8] sm:$0xff]
    %v1493 = vld [vmem:[%s1490 + $0x10] sm:$0xff]
    %v1494 = vld [vmem:[%s1490 + $0x18] sm:$0xff]
    %1496 = vset.pattern.permute.xlu0 0
    %1497 = vperm.xlu0 %1496, %v1491
    %v1498 = vpop.permute.xlu0 %1497
    %1501 = vset.pattern.permute.xlu0 0
    %1502 = vperm.xlu0 %1501, %v1492
    %v1503 = vpop.permute.xlu0 %1502
    %1506 = vset.pattern.permute.xlu0 0
    %1507 = vperm.xlu0 %1506, %v1493
    %v1508 = vpop.permute.xlu0 %1507
    %1511 = vset.pattern.permute.xlu0 0
    %1512 = vperm.xlu0 %1511, %v1494
    %v1513 = vpop.permute.xlu0 %1512
    %v1516 = vsel %vm889, %v1486, 0
    %v1519 = vsel %vm889, %v1487, 0
    %v1522 = vsel %vm889, %v1488, 0
    %v1525 = vsel %vm889, %v1489, 0
    %1527 = vmatprep.subr.mxu0 0.0
    %1528 = vmatpush1.msra.mxu0 %v1481
    %1529 = vmatprep.subr.mxu0 0.0
    %1530 = vmatpush1.msra.mxu0 %v1482
    %1531 = vmatprep.subr.mxu0 0.0
    %1532 = vmatpush1.msra.mxu0 %v1483
    %1533 = vmatprep.subr.mxu0 0.0
    %1534 = vmatpush1.msra.mxu0 %v1484
    %1535 = vmatprep.subr.mxu0 0.0
    %1536 = vmatpush1.msra.mxu0 0.0
    %1537 = vmatprep.subr.mxu0 0.0
    %1538 = vmatpush1.msra.mxu0 0.0
    %1539 = vmatprep.subr.mxu0 0.0
    %1540 = vmatpush1.msra.mxu0 0.0
    %1541 = vmatprep.subr.mxu0 0.0
    %1542 = vmatpush1.msra.mxu0 0.0
    %1543 = vmatprep.subr.mxu0 0.0
    %1544 = vmatpush1.msra.mxu0 0.0
    %1545 = vmatprep.subr.mxu0 0.0
    %1546 = vmatpush1.msra.mxu0 0.0
    %1547 = vmatprep.subr.mxu0 0.0
    %1548 = vmatpush1.msra.mxu0 0.0
    %1549 = vmatprep.subr.mxu0 0.0
    %1550 = vmatpush1.msra.mxu0 0.0
    %1551 = vmatprep.subr.mxu0 0.0
    %1552 = vmatpush1.msra.mxu0 0.0
    %1553 = vmatprep.subr.mxu0 0.0
    %1554 = vmatpush1.msra.mxu0 0.0
    %1555 = vmatprep.subr.mxu0 0.0
    %1556 = vmatpush1.msra.mxu0 0.0
    %1557 = vmatprep.subr.mxu0 0.0
    %1558 = vmatpush1.msra.mxu0 0.0
    %1559 = vmatprep.subr.mxu0 0.0
    %1560 = vmatpush1.msra.mxu0 0.0
    %1561 = vmatprep.subr.mxu0 0.0
    %1562 = vmatpush1.msra.mxu0 0.0
    %1563 = vmatprep.subr.mxu0 0.0
    %1564 = vmatpush1.msra.mxu0 0.0
    %1565 = vmatprep.subr.mxu0 0.0
    %1566 = vmatpush1.msra.mxu0 0.0
    %1567 = vmatprep.subr.mxu0 0.0
    %1568 = vmatpush1.msra.mxu0 0.0
    %1569 = vmatprep.subr.mxu0 0.0
    %1570 = vmatpush1.msra.mxu0 0.0
    %1571 = vmatprep.subr.mxu0 0.0
    %1572 = vmatpush1.msra.mxu0 0.0
    %1573 = vmatprep.subr.mxu0 0.0
    %1574 = vmatpush1.msra.mxu0 0.0
    %1575 = vmatprep.subr.mxu0 0.0
    %1576 = vmatpush1.msra.mxu0 0.0
    %1577 = vmatprep.subr.mxu0 0.0
    %1578 = vmatpush1.msra.mxu0 0.0
    %1579 = vmatprep.subr.mxu0 0.0
    %1580 = vmatpush1.msra.mxu0 0.0
    %1581 = vmatprep.subr.mxu0 0.0
    %1582 = vmatpush1.msra.mxu0 0.0
    %1583 = vmatprep.subr.mxu0 0.0
    %1584 = vmatpush1.msra.mxu0 0.0
    %1585 = vmatprep.subr.mxu0 0.0
    %1586 = vmatpush1.msra.mxu0 0.0
    %1587 = vmatprep.subr.mxu0 0.0
    %1588 = vmatpush1.msra.mxu0 0.0
    %1589 = vmatprep.subr.mxu0 0.0
    %1590 = vmatpush1.msra.mxu0 0.0
    %1591 = vmatprep.mubr.f32.mxu0 0.0
    %1592 = vmatmul.mubr.f32.gmra.mrb[0].mxu0 %v1516
    %v1593 = vpop.f32.mrb[0].mxu0
    %v1594 = vadd.f32 %v1498, %v1593
    %v1595 = vpop.f32.mrb[0].mxu0
    %1596 = vmatprep.mubr.f32.mxu0 0.0
    %1597 = vmatmul.mubr.f32.gmra.mrb[0].mxu0 %v1519
    %v1598 = vpop.f32.mrb[0].mxu0
    %v1599 = vadd.f32 %v1503, %v1598
    %v1600 = vpop.f32.mrb[0].mxu0
    %1601 = vmatprep.mubr.f32.mxu0 0.0
    %1602 = vmatmul.mubr.f32.gmra.mrb[0].mxu0 %v1522
    %v1603 = vpop.f32.mrb[0].mxu0
    %v1604 = vadd.f32 %v1508, %v1603
    %v1605 = vpop.f32.mrb[0].mxu0
    %1606 = vmatprep.mubr.f32.mxu0 0.0
    %1607 = vmatmul.mubr.f32.gmra.mrb[0].mxu0 %v1525
    %v1608 = vpop.f32.mrb[0].mxu0
    %v1609 = vadd.f32 %v1513, %v1608
    %v1610 = vpop.f32.mrb[0].mxu0
    %1611 = vdwg.mxu0
    %v1612 = vtanh.pop %v1594
    %v1613 = vtanh.pop %v1599
    %v1614 = vtanh.pop %v1604
    %v1615 = vtanh.pop %v1609
    %s1616 = scalar_lea.vmem %s1, 160
    %v1617 = vld [vmem:[%s1616] sm:$0xff]
    %v1618 = vld [vmem:[%s1616 + $0x8] sm:$0xff]
    %v1619 = vld [vmem:[%s1616 + $0x10] sm:$0xff]
    %v1620 = vld [vmem:[%s1616 + $0x18] sm:$0xff]
    %s1621 = scalar_lea.vmem %s2, 128
    %v1622 = vld [vmem:[%s1621] sm:$0xff]
    %v1623 = vld [vmem:[%s1621 + $0x8] sm:$0xff]
    %v1624 = vld [vmem:[%s1621 + $0x10] sm:$0xff]
    %v1625 = vld [vmem:[%s1621 + $0x18] sm:$0xff]
    %1627 = vset.pattern.permute.xlu0 0
    %1628 = vperm.xlu0 %1627, %v1622
    %v1629 = vpop.permute.xlu0 %1628
    %1632 = vset.pattern.permute.xlu0 0
    %1633 = vperm.xlu0 %1632, %v1623
    %v1634 = vpop.permute.xlu0 %1633
    %1637 = vset.pattern.permute.xlu0 0
    %1638 = vperm.xlu0 %1637, %v1624
    %v1639 = vpop.permute.xlu0 %1638
    %1642 = vset.pattern.permute.xlu0 0
    %1643 = vperm.xlu0 %1642, %v1625
    %v1644 = vpop.permute.xlu0 %1643
    %v1647 = vsel %vm889, %v1617, 0
    %v1650 = vsel %vm889, %v1618, 0
    %v1653 = vsel %vm889, %v1619, 0
    %v1656 = vsel %vm889, %v1620, 0
    %1658 = vmatprep.subr.mxu0 0.0
    %1659 = vmatpush1.msra.mxu0 %v1612
    %1660 = vmatprep.subr.mxu0 0.0
    %1661 = vmatpush1.msra.mxu0 %v1613
    %1662 = vmatprep.subr.mxu0 0.0
    %1663 = vmatpush1.msra.mxu0 %v1614
    %1664 = vmatprep.subr.mxu0 0.0
    %1665 = vmatpush1.msra.mxu0 %v1615
    %1666 = vmatprep.subr.mxu0 0.0
    %1667 = vmatpush1.msra.mxu0 0.0
    %1668 = vmatprep.subr.mxu0 0.0
    %1669 = vmatpush1.msra.mxu0 0.0
    %1670 = vmatprep.subr.mxu0 0.0
    %1671 = vmatpush1.msra.mxu0 0.0
    %1672 = vmatprep.subr.mxu0 0.0
    %1673 = vmatpush1.msra.mxu0 0.0
    %1674 = vmatprep.subr.mxu0 0.0
    %1675 = vmatpush1.msra.mxu0 0.0
    %1676 = vmatprep.subr.mxu0 0.0
    %1677 = vmatpush1.msra.mxu0 0.0
    %1678 = vmatprep.subr.mxu0 0.0
    %1679 = vmatpush1.msra.mxu0 0.0
    %1680 = vmatprep.subr.mxu0 0.0
    %1681 = vmatpush1.msra.mxu0 0.0
    %1682 = vmatprep.subr.mxu0 0.0
    %1683 = vmatpush1.msra.mxu0 0.0
    %1684 = vmatprep.subr.mxu0 0.0
    %1685 = vmatpush1.msra.mxu0 0.0
    %1686 = vmatprep.subr.mxu0 0.0
    %1687 = vmatpush1.msra.mxu0 0.0
    %1688 = vmatprep.subr.mxu0 0.0
    %1689 = vmatpush1.msra.mxu0 0.0
    %1690 = vmatprep.subr.mxu0 0.0
    %1691 = vmatpush1.msra.mxu0 0.0
    %1692 = vmatprep.subr.mxu0 0.0
    %1693 = vmatpush1.msra.mxu0 0.0
    %1694 = vmatprep.subr.mxu0 0.0
    %1695 = vmatpush1.msra.mxu0 0.0
    %1696 = vmatprep.subr.mxu0 0.0
    %1697 = vmatpush1.msra.mxu0 0.0
    %1698 = vmatprep.subr.mxu0 0.0
    %1699 = vmatpush1.msra.mxu0 0.0
    %1700 = vmatprep.subr.mxu0 0.0
    %1701 = vmatpush1.msra.mxu0 0.0
    %1702 = vmatprep.subr.mxu0 0.0
    %1703 = vmatpush1.msra.mxu0 0.0
    %1704 = vmatprep.subr.mxu0 0.0
    %1705 = vmatpush1.msra.mxu0 0.0
    %1706 = vmatprep.subr.mxu0 0.0
    %1707 = vmatpush1.msra.mxu0 0.0
    %1708 = vmatprep.subr.mxu0 0.0
    %1709 = vmatpush1.msra.mxu0 0.0
    %1710 = vmatprep.subr.mxu0 0.0
    %1711 = vmatpush1.msra.mxu0 0.0
    %1712 = vmatprep.subr.mxu0 0.0
    %1713 = vmatpush1.msra.mxu0 0.0
    %1714 = vmatprep.subr.mxu0 0.0
    %1715 = vmatpush1.msra.mxu0 0.0
    %1716 = vmatprep.subr.mxu0 0.0
    %1717 = vmatpush1.msra.mxu0 0.0
    %1718 = vmatprep.subr.mxu0 0.0
    %1719 = vmatpush1.msra.mxu0 0.0
    %1720 = vmatprep.subr.mxu0 0.0
    %1721 = vmatpush1.msra.mxu0 0.0
    %1722 = vmatprep.mubr.f32.mxu0 0.0
    %1723 = vmatmul.mubr.f32.gmra.mrb[0].mxu0 %v1647
    %v1724 = vpop.f32.mrb[0].mxu0
    %v1725 = vadd.f32 %v1629, %v1724
    %v1726 = vpop.f32.mrb[0].mxu0
    %1727 = vmatprep.mubr.f32.mxu0 0.0
    %1728 = vmatmul.mubr.f32.gmra.mrb[0].mxu0 %v1650
    %v1729 = vpop.f32.mrb[0].mxu0
    %v1730 = vadd.f32 %v1634, %v1729
    %v1731 = vpop.f32.mrb[0].mxu0
    %1732 = vmatprep.mubr.f32.mxu0 0.0
    %1733 = vmatmul.mubr.f32.gmra.mrb[0].mxu0 %v1653
    %v1734 = vpop.f32.mrb[0].mxu0
    %v1735 = vadd.f32 %v1639, %v1734
    %v1736 = vpop.f32.mrb[0].mxu0
    %1737 = vmatprep.mubr.f32.mxu0 0.0
    %1738 = vmatmul.mubr.f32.gmra.mrb[0].mxu0 %v1656
    %v1739 = vpop.f32.mrb[0].mxu0
    %v1740 = vadd.f32 %v1644, %v1739
    %v1741 = vpop.f32.mrb[0].mxu0
    %1742 = vdwg.mxu0
    %v1743 = vtanh.pop %v1725
    %v1744 = vtanh.pop %v1730
    %v1745 = vtanh.pop %v1735
    %v1746 = vtanh.pop %v1740
    %s1747 = scalar_lea.vmem %s1, 192
    %v1748 = vld [vmem:[%s1747] sm:$0xff]
    %v1749 = vld [vmem:[%s1747 + $0x8] sm:$0xff]
    %v1750 = vld [vmem:[%s1747 + $0x10] sm:$0xff]
    %v1751 = vld [vmem:[%s1747 + $0x18] sm:$0xff]
    %s1752 = scalar_lea.vmem %s2, 160
    %v1753 = vld [vmem:[%s1752] sm:$0xff]
    %v1754 = vld [vmem:[%s1752 + $0x8] sm:$0xff]
    %v1755 = vld [vmem:[%s1752 + $0x10] sm:$0xff]
    %v1756 = vld [vmem:[%s1752 + $0x18] sm:$0xff]
    %1758 = vset.pattern.permute.xlu0 0
    %1759 = vperm.xlu0 %1758, %v1753
    %v1760 = vpop.permute.xlu0 %1759
    %1763 = vset.pattern.permute.xlu0 0
    %1764 = vperm.xlu0 %1763, %v1754
    %v1765 = vpop.permute.xlu0 %1764
    %1767 = vset.pattern.permute.xlu0 0
    %1768 = vperm.xlu0 %1767, %v1755
    %v1769 = vpop.permute.xlu0 %1768
    %1771 = vset.pattern.permute.xlu0 0
    %1772 = vperm.xlu0 %1771, %v1756
    %v1773 = vpop.permute.xlu0 %1772
    %v1775 = vsel %vm889, %v1748, 0
    %v1778 = vsel %vm889, %v1749, 0
    %v1781 = vsel %vm889, %v1750, 0
    %v1784 = vsel %vm889, %v1751, 0
    %1786 = vmatprep.subr.mxu0 0.0
    %1787 = vmatpush1.msra.mxu0 %v1743
    %1788 = vmatprep.subr.mxu0 0.0
    %1789 = vmatpush1.msra.mxu0 %v1744
    %1790 = vmatprep.subr.mxu0 0.0
    %1791 = vmatpush1.msra.mxu0 %v1745
    %1792 = vmatprep.subr.mxu0 0.0
    %1793 = vmatpush1.msra.mxu0 %v1746
    %1794 = vmatprep.subr.mxu0 0.0
    %1795 = vmatpush1.msra.mxu0 0.0
    %1796 = vmatprep.subr.mxu0 0.0
    %1797 = vmatpush1.msra.mxu0 0.0
    %1798 = vmatprep.subr.mxu0 0.0
    %1799 = vmatpush1.msra.mxu0 0.0
    %1800 = vmatprep.subr.mxu0 0.0
    %1801 = vmatpush1.msra.mxu0 0.0
    %1802 = vmatprep.subr.mxu0 0.0
    %1803 = vmatpush1.msra.mxu0 0.0
    %1804 = vmatprep.subr.mxu0 0.0
    %1805 = vmatpush1.msra.mxu0 0.0
    %1806 = vmatprep.subr.mxu0 0.0
    %1807 = vmatpush1.msra.mxu0 0.0
    %1808 = vmatprep.subr.mxu0 0.0
    %1809 = vmatpush1.msra.mxu0 0.0
    %1810 = vmatprep.subr.mxu0 0.0
    %1811 = vmatpush1.msra.mxu0 0.0
    %1812 = vmatprep.subr.mxu0 0.0
    %1813 = vmatpush1.msra.mxu0 0.0
    %1814 = vmatprep.subr.mxu0 0.0
    %1815 = vmatpush1.msra.mxu0 0.0
    %1816 = vmatprep.subr.mxu0 0.0
    %1817 = vmatpush1.msra.mxu0 0.0
    %1818 = vmatprep.subr.mxu0 0.0
    %1819 = vmatpush1.msra.mxu0 0.0
    %1820 = vmatprep.subr.mxu0 0.0
    %1821 = vmatpush1.msra.mxu0 0.0
    %1822 = vmatprep.subr.mxu0 0.0
    %1823 = vmatpush1.msra.mxu0 0.0
    %1824 = vmatprep.subr.mxu0 0.0
    %1825 = vmatpush1.msra.mxu0 0.0
    %1826 = vmatprep.subr.mxu0 0.0
    %1827 = vmatpush1.msra.mxu0 0.0
    %1828 = vmatprep.subr.mxu0 0.0
    %1829 = vmatpush1.msra.mxu0 0.0
    %1830 = vmatprep.subr.mxu0 0.0
    %1831 = vmatpush1.msra.mxu0 0.0
    %1832 = vmatprep.subr.mxu0 0.0
    %1833 = vmatpush1.msra.mxu0 0.0
    %1834 = vmatprep.subr.mxu0 0.0
    %1835 = vmatpush1.msra.mxu0 0.0
    %1836 = vmatprep.subr.mxu0 0.0
    %1837 = vmatpush1.msra.mxu0 0.0
    %1838 = vmatprep.subr.mxu0 0.0
    %1839 = vmatpush1.msra.mxu0 0.0
    %1840 = vmatprep.subr.mxu0 0.0
    %1841 = vmatpush1.msra.mxu0 0.0
    %1842 = vmatprep.subr.mxu0 0.0
    %1843 = vmatpush1.msra.mxu0 0.0
    %1844 = vmatprep.subr.mxu0 0.0
    %1845 = vmatpush1.msra.mxu0 0.0
    %1846 = vmatprep.subr.mxu0 0.0
    %1847 = vmatpush1.msra.mxu0 0.0
    %1848 = vmatprep.subr.mxu0 0.0
    %1849 = vmatpush1.msra.mxu0 0.0
    %1850 = vmatprep.mubr.f32.mxu0 0.0
    %1851 = vmatmul.mubr.f32.gmra.mrb[0].mxu0 %v1775
    %v1852 = vpop.f32.mrb[0].mxu0
    %v1853 = vadd.f32 %v1760, %v1852
    %v1854 = vpop.f32.mrb[0].mxu0
    %1855 = vmatprep.mubr.f32.mxu0 0.0
    %1856 = vmatmul.mubr.f32.gmra.mrb[0].mxu0 %v1778
    %v1857 = vpop.f32.mrb[0].mxu0
    %v1858 = vpop.f32.mrb[0].mxu0
    %1859 = vmatprep.mubr.f32.mxu0 0.0
    %1860 = vmatmul.mubr.f32.gmra.mrb[0].mxu0 %v1781
    %v1861 = vpop.f32.mrb[0].mxu0
    %v1862 = vpop.f32.mrb[0].mxu0
    %1863 = vmatprep.mubr.f32.mxu0 0.0
    %1864 = vmatmul.mubr.f32.gmra.mrb[0].mxu0 %v1784
    %v1865 = vpop.f32.mrb[0].mxu0
    %v1866 = vpop.f32.mrb[0].mxu0
    %1867 = vdwg.mxu0
    %1868 = vst [vmem:[#allocation2] sm:$0xf] %v1853
    // Predicated region
    $region18: #{tpu_custom_call.1} parent=1 // pred_check
      _
    $region19: #{tpu_custom_call.1} parent=1 // pred_check_branch
      %1870 = sbr.rel (0) target = $region21
    $region20: #{tpu_custom_call.1} parent=1 // pred_region
      %s1872 = ssub.s32 64, 64
      %1873 = vsyncadd [#allocation3], %s1872
      %s1875 = sshll.u32 [#allocation2], 4
      %s1876 = int_to_ptr.vmem [resolvable:$true] %s1875
      %1878 = dma.vmem_to_hbm [thread:$0]  %s1876, 64, %s4, [#allocation3]
    $region21: #{tpu_custom_call.1} parent=1 // pred_fallthru
      _
    // Predicated region
    $region22: #{tpu_custom_call.1} parent=1 // pred_check
      _
    $region23: #{tpu_custom_call.1} parent=1 // pred_check_branch
      %1880 = sbr.rel (0) target = $region25
    $region24: #{tpu_custom_call.1} parent=1 // pred_region
      %1881 = dma.done [#allocation3], 64
    $region25: #{tpu_custom_call.1} parent=1 // pred_fallthru
      _
    %1882 = vsyncpa [#allocation3], 1

</llo_original>
